<compile_context>
chip_gen: v6e
topology: v6e:2x2x1
jax: 0.10.0
libtpu: 0.0.40
codegen_flags: <defaults>
</compile_context>

<pallas_src>
import jax
import jax.numpy as jnp
from jax import lax
from jax.experimental import pallas as pl
from jax.experimental.pallas import tpu as pltpu

# --- module hyperparameters (defaults of LCMipNet.__init__) ---
IN_FEATURES = 6
OUT_FEATURES = 3
LAYERS = 4
HIDDEN = 64
LATENT = 64
FACTORS = [(0.25, 0.25), (0.5, 0.5), (0.75, 0.75), (1.0, 1.0)]
NUM_LODS = len(FACTORS)
INPUT_SIZE = IN_FEATURES + LATENT
LN_EPS = 1e-5
NLN = LAYERS - 1                       # number of LayerNorms

# extended factors exactly as built in forward():
FACTORS_EXT = [tuple(FACTORS[0]) + (0.0, 0.0)] + [
    tuple(a) + tuple(b) for a, b in zip(FACTORS[1:], FACTORS[:-1])
]

MAX_ROW_TILE = 2048                    # rows (batch points) per grid step


def _align8(n):
    return (n + 7) // 8 * 8


def _round_up(n, m):
    return -(-n // m) * m


# ----- packed parameter buffer layout: (P_ROWS, HIDDEN) f32, 8-aligned segs ---
OFF_W0X = 0                                            # W0_x^T      (IN_F, H)
OFF_B0L = _align8(OFF_W0X + IN_FEATURES)               # fused b0    (NUM_LODS, H)
OFF_LNW = _align8(OFF_B0L + NUM_LODS)                  # ln weights  (NLN, H)
OFF_LNB = _align8(OFF_LNW + NLN)                       # ln biases   (NLN, H)
OFF_WMID = _align8(OFF_LNB + NLN)                      # mid W^T     ((L-2)*H, H)
OFF_BMID = _align8(OFF_WMID + (LAYERS - 2) * HIDDEN)   # mid biases  (L-2, H)
OFF_WOUT = _align8(OFF_BMID + (LAYERS - 2))            # Wout rows   (OUT, H)
OFF_BOUT = _align8(OFF_WOUT + OUT_FEATURES)            # bout in col0 (OUT, 1)
P_ROWS = _align8(OFF_BOUT + OUT_FEATURES)


def _active_widths():
    """Per-(lod, layernorm) active hidden widths, (NUM_LODS, NLN) int32."""
    rows = []
    for lod in range(NUM_LODS):
        f = FACTORS_EXT[lod]
        rows.append([int(round(HIDDEN * f[j % 2])) for j in range(NLN)])
    return jnp.asarray(rows, dtype=jnp.int32)


# ----------------------------- Pallas kernel -----------------------------
def _mipnet_kernel(hs_ref, inv_ref, x_ref, p_ref, o_ref):
    lod = pl.program_id(1)
    x = x_ref[...]                                        # (TILE, IN_FEATURES)
    col = lax.broadcasted_iota(jnp.int32, (1, HIDDEN), 1)
    ones_h1 = jnp.ones((HIDDEN, 1), jnp.float32)          # MXU-reduction vector

    def ln_relu(y, j):
        h = hs_ref[lod, j]                                # int32 scalar (SMEM)
        inv_h = inv_ref[lod, j]                           # f32 scalar (SMEM)
        mask = col < h                                    # (1, HIDDEN)
        y = jnp.where(mask, y, 0.0)
        # row reductions on the (otherwise idle) MXU instead of the XLU
        mean = jnp.dot(y, ones_h1, preferred_element_type=jnp.float32) * inv_h
        d = jnp.where(mask, y - mean, 0.0)
        var = jnp.dot(d * d, ones_h1, preferred_element_type=jnp.float32) * inv_h
        ynorm = d * lax.rsqrt(var + LN_EPS)
        w = p_ref[OFF_LNW + j:OFF_LNW + j + 1, :]         # (1, HIDDEN)
        b = p_ref[OFF_LNB + j:OFF_LNB + j + 1, :]         # (1, HIDDEN)
        y = jnp.where(mask, w * ynorm + b, 0.0)
        return jnp.maximum(y, 0.0)                        # ReLU

    # ----- layer 0: x @ W0_x^T + (b0 + latent_code @ W0_latent^T) -----
    w0x = p_ref[OFF_W0X:OFF_W0X + IN_FEATURES, :]         # (IN_F, HIDDEN)
    b0l_all = p_ref[OFF_B0L:OFF_B0L + NUM_LODS, :]        # (NUM_LODS, HIDDEN)
    sel = lax.broadcasted_iota(jnp.int32, (NUM_LODS, 1), 0) == lod
    b0l = jnp.sum(jnp.where(sel, b0l_all, 0.0), axis=0, keepdims=True)  # (1, H)
    y = jnp.dot(x, w0x, preferred_element_type=jnp.float32) + b0l
    y = ln_relu(y, 0)

    # ----- mid layers: full-width matmuls; zero-padded inactive lanes make
    #       them equal to the factor-truncated matmuls -----
    for i in range(1, LAYERS - 1):
        w = p_ref[OFF_WMID + (i - 1) * HIDDEN:OFF_WMID + i * HIDDEN, :]
        b = p_ref[OFF_BMID + (i - 1):OFF_BMID + i, :]
        y = jnp.dot(y, w, preferred_element_type=jnp.float32) + b
        y = ln_relu(y, i)

    # ----- output layer, emitted transposed (OUT, TILE) for lane-dense stores -
    wout = p_ref[OFF_WOUT:OFF_WOUT + OUT_FEATURES, :]     # (OUT, HIDDEN)
    bout = p_ref[OFF_BOUT:OFF_BOUT + OUT_FEATURES, 0:1]   # (OUT, 1)
    out = lax.dot_general(wout, y, (((1,), (1,)), ((), ())),
                          preferred_element_type=jnp.float32) + bout
    o_ref[...] = out                                      # (OUT, TILE)


# ----------------------------- host-side packing -----------------------------
def _pack_params(params):
    """Pack all weights into one (P_ROWS, HIDDEN) f32 buffer."""
    w0 = params["w0"]                                     # (HIDDEN, INPUT_SIZE)
    lc = params["latent_codes"]                           # (NUM_LODS, LATENT)
    lc_proj = jnp.dot(lc, w0[:, IN_FEATURES:].T,
                      precision=lax.Precision.HIGHEST)    # (NUM_LODS, HIDDEN)
    b0l = params["b0"][None, :] + lc_proj                 # fused per-LoD bias

    buf = jnp.zeros((P_ROWS, HIDDEN), jnp.float32)
    buf = buf.at[OFF_W0X:OFF_W0X + IN_FEATURES, :].set(w0[:, :IN_FEATURES].T)
    buf = buf.at[OFF_B0L:OFF_B0L + NUM_LODS, :].set(b0l)
    buf = buf.at[OFF_LNW:OFF_LNW + NLN, :].set(params["ln_w"])
    buf = buf.at[OFF_LNB:OFF_LNB + NLN, :].set(params["ln_b"])
    for i in range(LAYERS - 2):
        buf = buf.at[OFF_WMID + i * HIDDEN:OFF_WMID + (i + 1) * HIDDEN, :].set(
            params["w_mid"][i].T)
    buf = buf.at[OFF_BMID:OFF_BMID + (LAYERS - 2), :].set(params["b_mid"])
    buf = buf.at[OFF_WOUT:OFF_WOUT + OUT_FEATURES, :].set(params["w_out"])
    buf = buf.at[OFF_BOUT:OFF_BOUT + OUT_FEATURES, 0].set(params["b_out"])
    return buf


# ----------------------------- wrapper -----------------------------
def lcmipnet_forward(x, params):
    """x: (B, IN_FEATURES) float32.  Returns (B, NUM_LODS, OUT_FEATURES)."""
    B = x.shape[0]
    # Row tile: multiple of 128 (lane-dense output), capped at MAX_ROW_TILE.
    # The LoD grid axis always has NUM_LODS parallel steps, so v7x's 2 TCs get
    # work even when the row axis collapses to a single tile.
    tile = min(MAX_ROW_TILE, _round_up(B, 128))
    rows_pad = _round_up(B, tile)
    num_tiles = rows_pad // tile

    x_pad = x.astype(jnp.float32)
    if rows_pad > B:
        x_pad = jnp.pad(x_pad, ((0, rows_pad - B), (0, 0)))

    pbuf = _pack_params(params)
    hs = _active_widths()                                 # (NUM_LODS, NLN) i32
    inv_hs = 1.0 / hs.astype(jnp.float32)                 # (NUM_LODS, NLN) f32

    out = pl.pallas_call(
        _mipnet_kernel,
        out_shape=jax.ShapeDtypeStruct((NUM_LODS, OUT_FEATURES, rows_pad),
                                       jnp.float32),
        grid_spec=pltpu.PrefetchScalarGridSpec(
            num_scalar_prefetch=2,
            grid=(num_tiles, NUM_LODS),
            in_specs=[
                pl.BlockSpec((tile, IN_FEATURES), lambda r, l, hs, inv: (r, 0)),
                pl.BlockSpec((P_ROWS, HIDDEN), lambda r, l, hs, inv: (0, 0)),
            ],
            out_specs=pl.BlockSpec((None, OUT_FEATURES, tile),
                                   lambda r, l, hs, inv: (l, 0, r)),
        ),
        compiler_params=pltpu.CompilerParams(
            dimension_semantics=("parallel", "parallel")),
    )(hs, inv_hs, x_pad, pbuf)

    # (NUM_LODS, OUT, rows_pad) -> (B, NUM_LODS, OUT); tiny wrapper transpose.
    return jnp.transpose(out[:, :, :B], (2, 0, 1))


# ----------------------------- pure-JAX reference -----------------------------
def reference_forward(x, params):
    HP = lax.Precision.HIGHEST
    outs = []
    for lod in range(NUM_LODS):
        f = FACTORS_EXT[lod]
        lc = params["latent_codes"][lod]
        y = jnp.concatenate(
            [x, jnp.broadcast_to(lc[None], (x.shape[0], LATENT))], axis=1)
        # layer 0 (in-factor = 1)
        h0 = int(round(HIDDEN * f[0]))
        y = jnp.dot(y, params["w0"][:h0, :].T, precision=HP) + params["b0"][:h0][None]
        mean = jnp.mean(y, axis=1, keepdims=True)
        var = jnp.mean((y - mean) ** 2, axis=1, keepdims=True)
        y = (y - mean) / jnp.sqrt(var + LN_EPS)
        y = params["ln_w"][0, :h0] * y + params["ln_b"][0, :h0]
        y = jnp.maximum(y, 0.0)
        for i in range(1, LAYERS - 1):
            ho = int(round(HIDDEN * f[i % 2]))
            hi = int(round(HIDDEN * f[(i + 1) % 2]))
            y = (jnp.dot(y, params["w_mid"][i - 1][:ho, :hi].T, precision=HP)
                 + params["b_mid"][i - 1][:ho][None])
            mean = jnp.mean(y, axis=1, keepdims=True)
            var = jnp.mean((y - mean) ** 2, axis=1, keepdims=True)
            y = (y - mean) / jnp.sqrt(var + LN_EPS)
            y = params["ln_w"][i, :ho] * y + params["ln_b"][i, :ho]
            y = jnp.maximum(y, 0.0)
        hin = int(round(HIDDEN * f[LAYERS % 2]))
        y = jnp.dot(y, params["w_out"][:, :hin].T, precision=HP) + params["b_out"][None]
        outs.append(y)
    return jnp.stack(outs, axis=1)


# ----------------------------- parameter init -----------------------------
def init_params(key):
    ks = jax.random.split(key, 8)

    def lin(k, out_f, in_f):
        kw, kb = jax.random.split(k)
        bound = 1.0 / jnp.sqrt(jnp.float32(in_f))
        w = jax.random.uniform(kw, (out_f, in_f), jnp.float32, -bound, bound)
        b = jax.random.uniform(kb, (out_f,), jnp.float32, -bound, bound)
        return w, b

    w0, b0 = lin(ks[0], HIDDEN, INPUT_SIZE)
    w_mid, b_mid = [], []
    for i in range(LAYERS - 2):
        w, b = lin(ks[1 + i], HIDDEN, HIDDEN)
        w_mid.append(w)
        b_mid.append(b)
    w_out, b_out = lin(ks[5], OUT_FEATURES, HIDDEN)
    # PyTorch LayerNorm default init: weight=1, bias=0
    ln_w = jnp.ones((LAYERS - 1, HIDDEN), jnp.float32)
    ln_b = jnp.zeros((LAYERS - 1, HIDDEN), jnp.float32)
    # latent codes: uniform[0,1) then L2-normalized per row (as in __init__)
    lc = jax.random.uniform(ks[6], (NUM_LODS, LATENT), jnp.float32)
    lc = lc / jnp.linalg.norm(lc, axis=1, keepdims=True)
    return dict(
        w0=w0, b0=b0,
        w_mid=jnp.stack(w_mid), b_mid=jnp.stack(b_mid),
        w_out=w_out, b_out=b_out,
        ln_w=ln_w, ln_b=ln_b,
        latent_codes=lc,
    )


if __name__ == "__main__":
    key = jax.random.PRNGKey(0)
    pkey, xkey = jax.random.split(key)
    params = init_params(pkey)

    B = 8
    x = jax.random.normal(xkey, (B, IN_FEATURES), jnp.float32)

    fwd = jax.jit(lcmipnet_forward)
    out = jax.block_until_ready(fwd(x, params))

    ref = reference_forward(x, params)
    assert out.shape == (B, NUM_LODS, OUT_FEATURES), out.shape
    max_err = float(jnp.max(jnp.abs(out - ref)))
    assert jnp.allclose(out, ref, atol=1e-4, rtol=1e-4), max_err
    print("KERNEL_OK")
</pallas_src>

<mosaic_0001>
module attributes {stable_mosaic.version = 11 : i64} {
  func.func @_mipnet_kernel(%arg0: i32, %arg1: i32, %arg2: memref<4x3xi32, #tpu.memory_space<smem>>, %arg3: memref<4x3xf32, #tpu.memory_space<smem>>, %arg4: memref<128x6xf32, #tpu.memory_space<vmem>>, %arg5: memref<184x64xf32, #tpu.memory_space<vmem>>, %arg6: memref<1x3x128xf32, #tpu.memory_space<vmem>>) attributes {dimension_semantics = [#tpu.dimension_semantics<parallel>, #tpu.dimension_semantics<parallel>], iteration_bounds = array<i64: 1, 4>, scalar_prefetch = 2 : i64, scratch_operands = 0 : i64, tpu.core_type = #tpu.core_type<tc>, window_params = [{transform_indices = @transform_0, window_bounds = array<i64: 128, 6>}, {pipeline_mode = #tpu.pipeline_mode<synchronous>, transform_indices = @transform_1, window_bounds = array<i64: 184, 64>}, {transform_indices = @transform_2, window_bounds = array<i64: 1, 3, 128>}]} {
    %c0 = arith.constant 0 : index
    %c0_0 = arith.constant 0 : index
    %0 = vector.load %arg4[%c0, %c0_0] : memref<128x6xf32, #tpu.memory_space<vmem>>, vector<128x6xf32>
    %1 = tpu.iota {dimensions = array<i32: 1>} : vector<1x64xi32>
    %cst = arith.constant 1.000000e+00 : f32
    %2 = vector.broadcast %cst : f32 to vector<64x1xf32>
    %c0_1 = arith.constant 0 : index
    %c0_2 = arith.constant 0 : index
    %3 = vector.load %arg5[%c0_1, %c0_2] : memref<184x64xf32, #tpu.memory_space<vmem>>, vector<6x64xf32>
    %c8 = arith.constant 8 : index
    %c0_3 = arith.constant 0 : index
    %4 = vector.load %arg5[%c8, %c0_3] : memref<184x64xf32, #tpu.memory_space<vmem>>, vector<4x64xf32>
    %5 = tpu.iota {dimensions = array<i32: 0>} : vector<4x1xi32>
    %6 = vector.broadcast %arg1 : i32 to vector<4x1xi32>
    %7 = arith.cmpi eq, %5, %6 : vector<4x1xi32>
    %cst_4 = arith.constant 0.000000e+00 : f32
    %8 = vector.shape_cast %7 : vector<4x1xi1> to vector<4x1xi1>
    %9 = vector.broadcast %8 : vector<4x1xi1> to vector<4x64xi1>
    %10 = vector.broadcast %cst_4 : f32 to vector<4x64xf32>
    %11 = arith.select %9, %4, %10 : vector<4x64xi1>, vector<4x64xf32>
    %cst_5 = arith.constant dense<0.000000e+00> : vector<64xf32>
    %12 = vector.multi_reduction <add>, %11, %cst_5 [0] : vector<4x64xf32> to vector<64xf32>
    %13 = vector.shape_cast %12 : vector<64xf32> to vector<1x64xf32>
    %cst_6 = arith.constant dense<0.000000e+00> : vector<128x64xf32>
    %14 = tpu.matmul %0, %3, %cst_6 {dimension_numbers = #tpu.dot_dimension_numbers<[1], [0], [0], [1], [0, 0, 1, 1], [], []>} : vector<128x6xf32>, vector<6x64xf32>, vector<128x64xf32> -> vector<128x64xf32>
    %15 = vector.broadcast %13 : vector<1x64xf32> to vector<128x64xf32>
    %16 = arith.addf %14, %15 : vector<128x64xf32>
    %17 = arith.index_cast %arg1 : i32 to index
    %c0_7 = arith.constant 0 : index
    %18 = memref.load %arg2[%17, %c0_7] : memref<4x3xi32, #tpu.memory_space<smem>>
    %19 = arith.index_cast %arg1 : i32 to index
    %c0_8 = arith.constant 0 : index
    %20 = memref.load %arg3[%19, %c0_8] : memref<4x3xf32, #tpu.memory_space<smem>>
    %21 = vector.broadcast %18 : i32 to vector<1x64xi32>
    %22 = arith.cmpi slt, %1, %21 : vector<1x64xi32>
    %cst_9 = arith.constant 0.000000e+00 : f32
    %23 = vector.shape_cast %22 : vector<1x64xi1> to vector<1x64xi1>
    %24 = vector.broadcast %23 : vector<1x64xi1> to vector<128x64xi1>
    %25 = vector.broadcast %cst_9 : f32 to vector<128x64xf32>
    %26 = arith.select %24, %16, %25 : vector<128x64xi1>, vector<128x64xf32>
    %cst_10 = arith.constant dense<0.000000e+00> : vector<128x1xf32>
    %27 = tpu.matmul %26, %2, %cst_10 {dimension_numbers = #tpu.dot_dimension_numbers<[1], [0], [0], [1], [0, 0, 1, 1], [], []>} : vector<128x64xf32>, vector<64x1xf32>, vector<128x1xf32> -> vector<128x1xf32>
    %28 = vector.broadcast %20 : f32 to vector<128x1xf32>
    %29 = arith.mulf %27, %28 : vector<128x1xf32>
    %30 = vector.broadcast %29 : vector<128x1xf32> to vector<128x64xf32>
    %31 = arith.subf %26, %30 : vector<128x64xf32>
    %cst_11 = arith.constant 0.000000e+00 : f32
    %32 = vector.shape_cast %22 : vector<1x64xi1> to vector<1x64xi1>
    %33 = vector.broadcast %32 : vector<1x64xi1> to vector<128x64xi1>
    %34 = vector.broadcast %cst_11 : f32 to vector<128x64xf32>
    %35 = arith.select %33, %31, %34 : vector<128x64xi1>, vector<128x64xf32>
    %36 = arith.mulf %35, %35 : vector<128x64xf32>
    %cst_12 = arith.constant dense<0.000000e+00> : vector<128x1xf32>
    %37 = tpu.matmul %36, %2, %cst_12 {dimension_numbers = #tpu.dot_dimension_numbers<[1], [0], [0], [1], [0, 0, 1, 1], [], []>} : vector<128x64xf32>, vector<64x1xf32>, vector<128x1xf32> -> vector<128x1xf32>
    %38 = vector.broadcast %20 : f32 to vector<128x1xf32>
    %39 = arith.mulf %37, %38 : vector<128x1xf32>
    %cst_13 = arith.constant 9.99999974E-6 : f32
    %40 = vector.broadcast %cst_13 : f32 to vector<128x1xf32>
    %41 = arith.addf %39, %40 : vector<128x1xf32>
    %42 = math.rsqrt %41 : vector<128x1xf32>
    %43 = vector.broadcast %42 : vector<128x1xf32> to vector<128x64xf32>
    %44 = arith.mulf %35, %43 : vector<128x64xf32>
    %c16 = arith.constant 16 : index
    %c0_14 = arith.constant 0 : index
    %45 = vector.load %arg5[%c16, %c0_14] : memref<184x64xf32, #tpu.memory_space<vmem>>, vector<1x64xf32>
    %c24 = arith.constant 24 : index
    %c0_15 = arith.constant 0 : index
    %46 = vector.load %arg5[%c24, %c0_15] : memref<184x64xf32, #tpu.memory_space<vmem>>, vector<1x64xf32>
    %47 = vector.broadcast %45 : vector<1x64xf32> to vector<128x64xf32>
    %48 = arith.mulf %47, %44 : vector<128x64xf32>
    %49 = vector.broadcast %46 : vector<1x64xf32> to vector<128x64xf32>
    %50 = arith.addf %48, %49 : vector<128x64xf32>
    %cst_16 = arith.constant 0.000000e+00 : f32
    %51 = vector.shape_cast %22 : vector<1x64xi1> to vector<1x64xi1>
    %52 = vector.broadcast %51 : vector<1x64xi1> to vector<128x64xi1>
    %53 = vector.broadcast %cst_16 : f32 to vector<128x64xf32>
    %54 = arith.select %52, %50, %53 : vector<128x64xi1>, vector<128x64xf32>
    %cst_17 = arith.constant 0.000000e+00 : f32
    %55 = vector.broadcast %cst_17 : f32 to vector<128x64xf32>
    %56 = arith.maximumf %54, %55 : vector<128x64xf32>
    %c32 = arith.constant 32 : index
    %c0_18 = arith.constant 0 : index
    %57 = vector.load %arg5[%c32, %c0_18] : memref<184x64xf32, #tpu.memory_space<vmem>>, vector<64x64xf32>
    %c160 = arith.constant 160 : index
    %c0_19 = arith.constant 0 : index
    %58 = vector.load %arg5[%c160, %c0_19] : memref<184x64xf32, #tpu.memory_space<vmem>>, vector<1x64xf32>
    %cst_20 = arith.constant dense<0.000000e+00> : vector<128x64xf32>
    %59 = tpu.matmul %56, %57, %cst_20 {dimension_numbers = #tpu.dot_dimension_numbers<[1], [0], [0], [1], [0, 0, 1, 1], [], []>} : vector<128x64xf32>, vector<64x64xf32>, vector<128x64xf32> -> vector<128x64xf32>
    %60 = vector.broadcast %58 : vector<1x64xf32> to vector<128x64xf32>
    %61 = arith.addf %59, %60 : vector<128x64xf32>
    %62 = arith.index_cast %arg1 : i32 to index
    %c1 = arith.constant 1 : index
    %63 = memref.load %arg2[%62, %c1] : memref<4x3xi32, #tpu.memory_space<smem>>
    %64 = arith.index_cast %arg1 : i32 to index
    %c1_21 = arith.constant 1 : index
    %65 = memref.load %arg3[%64, %c1_21] : memref<4x3xf32, #tpu.memory_space<smem>>
    %66 = vector.broadcast %63 : i32 to vector<1x64xi32>
    %67 = arith.cmpi slt, %1, %66 : vector<1x64xi32>
    %cst_22 = arith.constant 0.000000e+00 : f32
    %68 = vector.shape_cast %67 : vector<1x64xi1> to vector<1x64xi1>
    %69 = vector.broadcast %68 : vector<1x64xi1> to vector<128x64xi1>
    %70 = vector.broadcast %cst_22 : f32 to vector<128x64xf32>
    %71 = arith.select %69, %61, %70 : vector<128x64xi1>, vector<128x64xf32>
    %cst_23 = arith.constant dense<0.000000e+00> : vector<128x1xf32>
    %72 = tpu.matmul %71, %2, %cst_23 {dimension_numbers = #tpu.dot_dimension_numbers<[1], [0], [0], [1], [0, 0, 1, 1], [], []>} : vector<128x64xf32>, vector<64x1xf32>, vector<128x1xf32> -> vector<128x1xf32>
    %73 = vector.broadcast %65 : f32 to vector<128x1xf32>
    %74 = arith.mulf %72, %73 : vector<128x1xf32>
    %75 = vector.broadcast %74 : vector<128x1xf32> to vector<128x64xf32>
    %76 = arith.subf %71, %75 : vector<128x64xf32>
    %cst_24 = arith.constant 0.000000e+00 : f32
    %77 = vector.shape_cast %67 : vector<1x64xi1> to vector<1x64xi1>
    %78 = vector.broadcast %77 : vector<1x64xi1> to vector<128x64xi1>
    %79 = vector.broadcast %cst_24 : f32 to vector<128x64xf32>
    %80 = arith.select %78, %76, %79 : vector<128x64xi1>, vector<128x64xf32>
    %81 = arith.mulf %80, %80 : vector<128x64xf32>
    %cst_25 = arith.constant dense<0.000000e+00> : vector<128x1xf32>
    %82 = tpu.matmul %81, %2, %cst_25 {dimension_numbers = #tpu.dot_dimension_numbers<[1], [0], [0], [1], [0, 0, 1, 1], [], []>} : vector<128x64xf32>, vector<64x1xf32>, vector<128x1xf32> -> vector<128x1xf32>
    %83 = vector.broadcast %65 : f32 to vector<128x1xf32>
    %84 = arith.mulf %82, %83 : vector<128x1xf32>
    %cst_26 = arith.constant 9.99999974E-6 : f32
    %85 = vector.broadcast %cst_26 : f32 to vector<128x1xf32>
    %86 = arith.addf %84, %85 : vector<128x1xf32>
    %87 = math.rsqrt %86 : vector<128x1xf32>
    %88 = vector.broadcast %87 : vector<128x1xf32> to vector<128x64xf32>
    %89 = arith.mulf %80, %88 : vector<128x64xf32>
    %c17 = arith.constant 17 : index
    %c0_27 = arith.constant 0 : index
    %90 = vector.load %arg5[%c17, %c0_27] : memref<184x64xf32, #tpu.memory_space<vmem>>, vector<1x64xf32>
    %c25 = arith.constant 25 : index
    %c0_28 = arith.constant 0 : index
    %91 = vector.load %arg5[%c25, %c0_28] : memref<184x64xf32, #tpu.memory_space<vmem>>, vector<1x64xf32>
    %92 = vector.broadcast %90 : vector<1x64xf32> to vector<128x64xf32>
    %93 = arith.mulf %92, %89 : vector<128x64xf32>
    %94 = vector.broadcast %91 : vector<1x64xf32> to vector<128x64xf32>
    %95 = arith.addf %93, %94 : vector<128x64xf32>
    %cst_29 = arith.constant 0.000000e+00 : f32
    %96 = vector.shape_cast %67 : vector<1x64xi1> to vector<1x64xi1>
    %97 = vector.broadcast %96 : vector<1x64xi1> to vector<128x64xi1>
    %98 = vector.broadcast %cst_29 : f32 to vector<128x64xf32>
    %99 = arith.select %97, %95, %98 : vector<128x64xi1>, vector<128x64xf32>
    %cst_30 = arith.constant 0.000000e+00 : f32
    %100 = vector.broadcast %cst_30 : f32 to vector<128x64xf32>
    %101 = arith.maximumf %99, %100 : vector<128x64xf32>
    %c96 = arith.constant 96 : index
    %c0_31 = arith.constant 0 : index
    %102 = vector.load %arg5[%c96, %c0_31] : memref<184x64xf32, #tpu.memory_space<vmem>>, vector<64x64xf32>
    %c161 = arith.constant 161 : index
    %c0_32 = arith.constant 0 : index
    %103 = vector.load %arg5[%c161, %c0_32] : memref<184x64xf32, #tpu.memory_space<vmem>>, vector<1x64xf32>
    %cst_33 = arith.constant dense<0.000000e+00> : vector<128x64xf32>
    %104 = tpu.matmul %101, %102, %cst_33 {dimension_numbers = #tpu.dot_dimension_numbers<[1], [0], [0], [1], [0, 0, 1, 1], [], []>} : vector<128x64xf32>, vector<64x64xf32>, vector<128x64xf32> -> vector<128x64xf32>
    %105 = vector.broadcast %103 : vector<1x64xf32> to vector<128x64xf32>
    %106 = arith.addf %104, %105 : vector<128x64xf32>
    %107 = arith.index_cast %arg1 : i32 to index
    %c2 = arith.constant 2 : index
    %108 = memref.load %arg2[%107, %c2] : memref<4x3xi32, #tpu.memory_space<smem>>
    %109 = arith.index_cast %arg1 : i32 to index
    %c2_34 = arith.constant 2 : index
    %110 = memref.load %arg3[%109, %c2_34] : memref<4x3xf32, #tpu.memory_space<smem>>
    %111 = vector.broadcast %108 : i32 to vector<1x64xi32>
    %112 = arith.cmpi slt, %1, %111 : vector<1x64xi32>
    %cst_35 = arith.constant 0.000000e+00 : f32
    %113 = vector.shape_cast %112 : vector<1x64xi1> to vector<1x64xi1>
    %114 = vector.broadcast %113 : vector<1x64xi1> to vector<128x64xi1>
    %115 = vector.broadcast %cst_35 : f32 to vector<128x64xf32>
    %116 = arith.select %114, %106, %115 : vector<128x64xi1>, vector<128x64xf32>
    %cst_36 = arith.constant dense<0.000000e+00> : vector<128x1xf32>
    %117 = tpu.matmul %116, %2, %cst_36 {dimension_numbers = #tpu.dot_dimension_numbers<[1], [0], [0], [1], [0, 0, 1, 1], [], []>} : vector<128x64xf32>, vector<64x1xf32>, vector<128x1xf32> -> vector<128x1xf32>
    %118 = vector.broadcast %110 : f32 to vector<128x1xf32>
    %119 = arith.mulf %117, %118 : vector<128x1xf32>
    %120 = vector.broadcast %119 : vector<128x1xf32> to vector<128x64xf32>
    %121 = arith.subf %116, %120 : vector<128x64xf32>
    %cst_37 = arith.constant 0.000000e+00 : f32
    %122 = vector.shape_cast %112 : vector<1x64xi1> to vector<1x64xi1>
    %123 = vector.broadcast %122 : vector<1x64xi1> to vector<128x64xi1>
    %124 = vector.broadcast %cst_37 : f32 to vector<128x64xf32>
    %125 = arith.select %123, %121, %124 : vector<128x64xi1>, vector<128x64xf32>
    %126 = arith.mulf %125, %125 : vector<128x64xf32>
    %cst_38 = arith.constant dense<0.000000e+00> : vector<128x1xf32>
    %127 = tpu.matmul %126, %2, %cst_38 {dimension_numbers = #tpu.dot_dimension_numbers<[1], [0], [0], [1], [0, 0, 1, 1], [], []>} : vector<128x64xf32>, vector<64x1xf32>, vector<128x1xf32> -> vector<128x1xf32>
    %128 = vector.broadcast %110 : f32 to vector<128x1xf32>
    %129 = arith.mulf %127, %128 : vector<128x1xf32>
    %cst_39 = arith.constant 9.99999974E-6 : f32
    %130 = vector.broadcast %cst_39 : f32 to vector<128x1xf32>
    %131 = arith.addf %129, %130 : vector<128x1xf32>
    %132 = math.rsqrt %131 : vector<128x1xf32>
    %133 = vector.broadcast %132 : vector<128x1xf32> to vector<128x64xf32>
    %134 = arith.mulf %125, %133 : vector<128x64xf32>
    %c18 = arith.constant 18 : index
    %c0_40 = arith.constant 0 : index
    %135 = vector.load %arg5[%c18, %c0_40] : memref<184x64xf32, #tpu.memory_space<vmem>>, vector<1x64xf32>
    %c26 = arith.constant 26 : index
    %c0_41 = arith.constant 0 : index
    %136 = vector.load %arg5[%c26, %c0_41] : memref<184x64xf32, #tpu.memory_space<vmem>>, vector<1x64xf32>
    %137 = vector.broadcast %135 : vector<1x64xf32> to vector<128x64xf32>
    %138 = arith.mulf %137, %134 : vector<128x64xf32>
    %139 = vector.broadcast %136 : vector<1x64xf32> to vector<128x64xf32>
    %140 = arith.addf %138, %139 : vector<128x64xf32>
    %cst_42 = arith.constant 0.000000e+00 : f32
    %141 = vector.shape_cast %112 : vector<1x64xi1> to vector<1x64xi1>
    %142 = vector.broadcast %141 : vector<1x64xi1> to vector<128x64xi1>
    %143 = vector.broadcast %cst_42 : f32 to vector<128x64xf32>
    %144 = arith.select %142, %140, %143 : vector<128x64xi1>, vector<128x64xf32>
    %cst_43 = arith.constant 0.000000e+00 : f32
    %145 = vector.broadcast %cst_43 : f32 to vector<128x64xf32>
    %146 = arith.maximumf %144, %145 : vector<128x64xf32>
    %c168 = arith.constant 168 : index
    %c0_44 = arith.constant 0 : index
    %147 = vector.load %arg5[%c168, %c0_44] : memref<184x64xf32, #tpu.memory_space<vmem>>, vector<3x64xf32>
    %c176 = arith.constant 176 : index
    %c0_45 = arith.constant 0 : index
    %148 = vector.load %arg5[%c176, %c0_45] : memref<184x64xf32, #tpu.memory_space<vmem>>, vector<3x1xf32>
    %cst_46 = arith.constant dense<0.000000e+00> : vector<3x128xf32>
    %149 = tpu.matmul %147, %146, %cst_46 {dimension_numbers = #tpu.dot_dimension_numbers<[1], [1], [0], [0], [0, 0, 1, 0], [], []>} : vector<3x64xf32>, vector<128x64xf32>, vector<3x128xf32> -> vector<3x128xf32>
    %150 = vector.broadcast %148 : vector<3x1xf32> to vector<3x128xf32>
    %151 = arith.addf %149, %150 : vector<3x128xf32>
    %c0_47 = arith.constant 0 : index
    %c0_48 = arith.constant 0 : index
    %c0_49 = arith.constant 0 : index
    %152 = vector.load %arg6[%c0_47, %c0_48, %c0_49] : memref<1x3x128xf32, #tpu.memory_space<vmem>>, vector<1x3x128xf32>
    %153 = vector.shape_cast %152 : vector<1x3x128xf32> to vector<3x128xf32>
    %154 = vector.shape_cast %151 : vector<3x128xf32> to vector<1x3x128xf32>
    tpu.vector_store %arg6[%c0_47, %c0_48, %c0_49], %154 {strides = array<i32>} : memref<1x3x128xf32, #tpu.memory_space<vmem>>, vector<1x3x128xf32>,
    return
  }
  func.func @transform_0(%arg0: i32, %arg1: i32, %arg2: memref<4x3xi32, #tpu.memory_space<smem>>, %arg3: memref<4x3xf32, #tpu.memory_space<smem>>) -> (i32, i32) {
    %c0_i32 = arith.constant 0 : i32
    %c0_i32_0 = arith.constant 0 : i32
    return %arg0, %c0_i32 : i32, i32
  }
  func.func @transform_1(%arg0: i32, %arg1: i32, %arg2: memref<4x3xi32, #tpu.memory_space<smem>>, %arg3: memref<4x3xf32, #tpu.memory_space<smem>>) -> (i32, i32) {
    %c0_i32 = arith.constant 0 : i32
    %c0_i32_0 = arith.constant 0 : i32
    %c0_i32_1 = arith.constant 0 : i32
    return %c0_i32, %c0_i32_0 : i32, i32
  }
  func.func @transform_2(%arg0: i32, %arg1: i32, %arg2: memref<4x3xi32, #tpu.memory_space<smem>>, %arg3: memref<4x3xf32, #tpu.memory_space<smem>>) -> (i32, i32, i32) {
    %c0_i32 = arith.constant 0 : i32
    %c0_i32_0 = arith.constant 0 : i32
    return %arg1, %c0_i32, %arg0 : i32, i32, i32
  }
}

</mosaic_0001>

<llo_original>
// kernel: lcmipnet_forward.1
$region0: #{lcmipnet_forward.1}
  #allocation0 [shape = 'u32[]', space=smem, size = 0x4, offset = 0x4, fixed_abs, tag = 'smem constant byte address 0x4 - core index']
  #allocation1 [shape = 'u32[144,128]{1,0:T(1,128)}', space=vmem, size = 0x12000, scoped, tag = 'internal scratch']
  #allocation2 [shape = 's32[1]{0}', space=sflag, size = 0x4, scoped, tag = 'scoped memory for lcmipnet_forward.1']
  #allocation3 [shape = 'u8[2048]{0}', space=smem, size = 0x800, scoped, tag = 'prefetched SMEM operand 0']
  #allocation4 [shape = 'u8[2048]{0}', space=smem, size = 0x800, scoped, tag = 'prefetched SMEM operand 1']
  %s0 = inlined_call_operand.vmem [shape: s32[4,3], index: 0, kind: input, shape index: {}]
  %s1 = inlined_call_operand.vmem [shape: f32[4,3], index: 1, kind: input, shape index: {}]
  %s2 = inlined_call_operand.vmem [shape: f32[128,6], index: 2, kind: input, shape index: {}]
  %s3 = inlined_call_operand.vmem [shape: f32[184,64], index: 3, kind: input, shape index: {}]
  %s4 = inlined_call_operand.vmem [shape: f32[4,3,128], index: 4, kind: output, shape index: {}]
  %s5 = sld [smem:[#allocation0]]
  $region41: #{lcmipnet_forward.1} parent=0
    _
  %s7 = ssub.s32 1, %s5
  %s8 = scalar_select 0, %s7, %s5
  %s9 = sshll.u32 %s0, 4
  %s10 = int_to_ptr.vmem [resolvable:$true] %s9
  %12 = dma.vmem_to_smem %s10, 64, [#allocation3], [#allocation2]
  %s13 = sshll.u32 %s1, 4
  %s14 = int_to_ptr.vmem [resolvable:$true] %s13
  %16 = dma.vmem_to_smem %s14, 64, [#allocation4], [#allocation2]
  %17 = dma.done [#allocation2], 128
  %18 = sfence
  loop: start=0, step=1, limit=6
  $region2: #{lcmipnet_forward.1} parent=0 // loop_pre_header
    _
  $region3: #{lcmipnet_forward.1} parent=0 // loop_header
    %s20 = sphi 0, %s24
    %p21 = scmp.ge.s32.totalorder %s20, 6
    %s27 = sphi 0, %s39
    %s28 = sphi 0, %s35
    %s29 = sphi 0, %s27
    %s30 = sphi 0, %s28
    %s31 = sphi 0, %s29
    %s32 = sphi 0, %s30
    %s42 = sphi 0, %s44
    %s45 = sphi 0, %s42
    %s46 = sphi 0, %s45
    %s62 = sphi 0, %s46
    %s66 = sphi 0, %s66
    %s68 = sphi 0, %s66
    %s69 = sphi 0, %s68
    %s83 = sphi 0, %s69
    %s91 = sphi 0, %s93
    %s94 = sphi 0, %s91
    %s95 = sphi 0, %s94
    %s111 = sphi 0, %s95
  $region4: #{lcmipnet_forward.1} parent=0 // loop_header_branch
    %23 = sbr.rel (%p21) target = $region8
  $region5: #{lcmipnet_forward.1} parent=0 // loop_body
    %s25 = ssub.s32 %s20, 1
    %s26 = ssub.s32 %s20, 2
    %s33 = sadd.s32 1, %s28
    %p34 = scmp.ge.s32.totalorder %s33, 4
    %s35 = scalar_select %p34, 0, %s33
    %s36 = sadd.s32 1, %s27
    %s37 = scalar_select %p34, %s36, %s27
    %p38 = scmp.ge.s32.totalorder %s37, 1
    %s39 = scalar_select %p38, 0, %s37
    %s40 = ssub.s32 %s27, %s39
    %p41 = scmp.eq.s32.totalorder %s40, 0
    %s43 = sadd.s32 %s42, 1
    %s44 = scalar_select %p41, %s42, %s43
    %p47 = pneg %p41
    %p48 = scmp.eq.s32.totalorder %s20, 3
    %p49 = por %p47, %p48
    %p50 = scmp.ne.s32.totalorder %s42, %s45
    %p51 = scmp.eq.s32.totalorder %s20, 0
    %p52 = por %p50, %p51
    %p53 = scmp.ne.s32.totalorder %s42, %s45
    %p54 = scmp.eq.s32.totalorder %s25, 3
    %p55 = por %p53, %p54
    %p56 = scmp.ne.s32.totalorder %s45, %s46
    %p57 = scmp.eq.s32.totalorder %s25, 0
    %p58 = por %p56, %p57
    %p59 = scmp.ne.s32.totalorder %s45, %s46
    %p60 = scmp.eq.s32.totalorder %s26, 3
    %p61 = por %p59, %p60
    %p63 = scmp.ne.s32.totalorder %s46, %s62
    %p64 = scmp.eq.s32.totalorder %s26, 0
    %p65 = por %p63, %p64
    %s67 = sadd.s32 %s66, 1
    %p70 = scmp.eq.s32.totalorder %s20, 3
    %p71 = scmp.ne.s32.totalorder %s66, %s68
    %p72 = scmp.eq.s32.totalorder %s20, 0
    %p73 = por %p71, %p72
    %p74 = scmp.ne.s32.totalorder %s66, %s68
    %p75 = scmp.eq.s32.totalorder %s25, 3
    %p76 = por %p74, %p75
    %p77 = scmp.ne.s32.totalorder %s68, %s69
    %p78 = scmp.eq.s32.totalorder %s25, 0
    %p79 = por %p77, %p78
    %p80 = scmp.ne.s32.totalorder %s68, %s69
    %p81 = scmp.eq.s32.totalorder %s26, 3
    %p82 = por %p80, %p81
    %p84 = scmp.ne.s32.totalorder %s69, %s83
    %p85 = scmp.eq.s32.totalorder %s26, 0
    %p86 = por %p84, %p85
    %s87 = ssub.s32 %s28, %s35
    %s88 = ssub.s32 %s27, %s39
    %s89 = sor.u32 %s87, %s88
    %p90 = scmp.eq.s32.totalorder %s89, 0
    %s92 = sadd.s32 %s91, 1
    %s93 = scalar_select %p90, %s91, %s92
    %p96 = pneg %p90
    %p97 = scmp.eq.s32.totalorder %s20, 3
    %p98 = por %p96, %p97
    %p99 = scmp.ne.s32.totalorder %s91, %s94
    %p100 = scmp.eq.s32.totalorder %s20, 0
    %p101 = por %p99, %p100
    %p102 = scmp.ne.s32.totalorder %s91, %s94
    %p103 = scmp.eq.s32.totalorder %s25, 3
    %p104 = por %p102, %p103
    %p105 = scmp.ne.s32.totalorder %s94, %s95
    %p106 = scmp.eq.s32.totalorder %s25, 0
    %p107 = por %p105, %p106
    %p108 = scmp.ne.s32.totalorder %s94, %s95
    %p109 = scmp.eq.s32.totalorder %s26, 3
    %p110 = por %p108, %p109
    %p112 = scmp.ne.s32.totalorder %s95, %s111
    %p113 = scmp.eq.s32.totalorder %s26, 0
    %p114 = por %p112, %p113
    %p115 = scmp.le.s32.totalorder 1, %s20
    %p116 = scmp.lt.s32.totalorder %s20, 5
    %p117 = pnand %p115, %p116
    %p118 = pneg %p117
    // Predicated region
    $region9: #{lcmipnet_forward.1} parent=5 // pred_check
      _
    $region10: #{lcmipnet_forward.1} parent=5 // pred_check_branch
      %120 = sbr.rel (%p117) target = $region12
    $region11: #{lcmipnet_forward.1} parent=5 // pred_region
      %s121 = ssub.s32 %s20, 1
      // Predicated region
      $region13: #{lcmipnet_forward.1} parent=11 // pred_check
        %p122 = pneg %p58
      $region14: #{lcmipnet_forward.1} parent=11 // pred_check_branch
        %124 = sbr.rel (%p122) target = $region16
      $region15: #{lcmipnet_forward.1} parent=11 // pred_region
        %s125 = smul.u32 16, %s29
        %p126 = scmp.lt.s32.totalorder %s125, 15
        %s127 = scalar_select %p126, %s125, 15
        %s128 = smul.addr %s127, 8
        %s129 = scalar_lea.vmem %s2, %s128
        %s130 = smul.u32 16, %s29
      $region16: #{lcmipnet_forward.1} parent=11 // pred_fallthru
        _
      // Predicated region
      $region17: #{lcmipnet_forward.1} parent=11 // pred_check
        %p131 = pneg %p79
      $region18: #{lcmipnet_forward.1} parent=11 // pred_check_branch
        %133 = sbr.rel (%p131) target = $region20
      $region19: #{lcmipnet_forward.1} parent=11 // pred_region
        _
      $region20: #{lcmipnet_forward.1} parent=11 // pred_fallthru
        _
    $region12: #{lcmipnet_forward.1} parent=5 // pred_fallthru
      _
    %p134 = scmp.lt.s32.totalorder %s20, 4
    // Predicated region
    $region21: #{lcmipnet_forward.1} parent=5 // pred_check
      %p135 = pneg %p134
    $region22: #{lcmipnet_forward.1} parent=5 // pred_check_branch
      %137 = sbr.rel (%p135) target = $region24
    $region23: #{lcmipnet_forward.1} parent=5 // pred_region
      _
    $region24: #{lcmipnet_forward.1} parent=5 // pred_fallthru
      _
    %p138 = scmp.le.s32.totalorder 1, %s20
    %p139 = scmp.lt.s32.totalorder %s20, 5
    %p140 = pnand %p138, %p139
    %p141 = pneg %p140
    // Predicated region
    $region25: #{lcmipnet_forward.1} parent=5 // pred_check
      _
    $region26: #{lcmipnet_forward.1} parent=5 // pred_check_branch
      %143 = sbr.rel (%p140) target = $region28
    $region27: #{lcmipnet_forward.1} parent=5 // pred_region
      %s144 = ssub.s32 %s20, 1
      %s145 = smul.u32 16, %s29
      %p146 = scmp.lt.s32.totalorder %s145, 15
      %s147 = scalar_select %p146, %s145, 15
      %s148 = smul.addr %s147, 8
      %s149 = scalar_lea.vmem %s2, %s148
      %p150 = pneg %p58
      %p151 = pneg %p55
      %p152 = pneg %p79
      %p153 = pneg %p76
      %p154 = pneg %p107
      %p155 = pneg %p104
      %p156 = scmp.lt.s32.totalorder %s30, 3
      %s157 = scalar_select %p156, %s30, 3
      %p158 = scmp.lt.s32.totalorder %s29, 0
      %s159 = scalar_select %p158, %s29, 0
      %s160 = sadd.s32 %s159, %s157
      %s161 = smul.addr %s160, 4
      %s162 = scalar_lea.vmem %s4, %s161
      %s163 = smul.u32 16, %s29
      %p164 = scmp.lt.s32.totalorder %s163, 15
      %s165 = scalar_select %p164, %s163, 15
      %s166 = smul.addr %s165, 8
      %s167 = scalar_lea.vmem %s2, %s166
      %s168 = smul.u32 16, %s29
      %p169 = scmp.lt.s32.totalorder %s30, 3
      %s170 = scalar_select %p169, %s30, 3
      %p171 = scmp.lt.s32.totalorder %s29, 0
      %s172 = scalar_select %p171, %s29, 0
      %s173 = sadd.s32 %s172, %s170
      %s174 = smul.addr %s173, 4
      %s175 = scalar_lea.vmem %s4, %s174
      %v176 = vld [vmem:[%s167] sm:$0xff]
      %v177 = vld [vmem:[%s167 + $0x8] sm:$0xff]
      %v178 = vld [vmem:[%s167 + $0x10] sm:$0xff]
      %v179 = vld [vmem:[%s167 + $0x18] sm:$0xff]
      %v180 = vld [vmem:[%s167 + $0x20] sm:$0xff]
      %v181 = vld [vmem:[%s167 + $0x28] sm:$0xff]
      %v182 = vld [vmem:[%s167 + $0x30] sm:$0xff]
      %v183 = vld [vmem:[%s167 + $0x38] sm:$0xff]
      %v184 = vld [vmem:[%s167 + $0x40] sm:$0xff]
      %v185 = vld [vmem:[%s167 + $0x48] sm:$0xff]
      %v186 = vld [vmem:[%s167 + $0x50] sm:$0xff]
      %v187 = vld [vmem:[%s167 + $0x58] sm:$0xff]
      %v188 = vld [vmem:[%s167 + $0x60] sm:$0xff]
      %v189 = vld [vmem:[%s167 + $0x68] sm:$0xff]
      %v190 = vld [vmem:[%s167 + $0x70] sm:$0xff]
      %v191 = vld [vmem:[%s167 + $0x78] sm:$0xff]
      %v192 = vlaneseq
      %v193 = vand.u32 %v192, 127
      %v194 = vld [vmem:[%s3] sm:$0x3f]
      %v195 = vld [vmem:[%s3 + $0x8] sm:$0xf]
      %v196 = vlaneseq
      %v197 = vshrl.u32 %v196, 7
      %v198 = vstv %s30
      %vm199 = vcmp.eq.s32.totalorder %v197, %v198
      %v200 = vsel %vm199, 1, 0
      %vm201 = vcmp.eq.s32.totalorder %v200, 1
      %v202 = vsel %vm201, %v195, 0.0
      %vm203 = vcmask 519168
      %v204 = vsel %vm203, %v202, 0.0
      %v205 = vrot.slane %v204, 4
      %v206 = vadd.f32 %v204, %v205
      %v207 = vrot.slane %v206, 2
      %v208 = vadd.f32 %v206, %v207
      %v209 = vrot.slane %v208, 1
      %v210 = vadd.f32 %v208, %v209
      %vm211 = vcmask 48128
      %v213 = vsel %vm211, %v176, 0
      %v216 = vsel %vm211, %v177, 0
      %v219 = vsel %vm211, %v178, 0
      %v222 = vsel %vm211, %v179, 0
      %v225 = vsel %vm211, %v180, 0
      %v228 = vsel %vm211, %v181, 0
      %v231 = vsel %vm211, %v182, 0
      %v234 = vsel %vm211, %v183, 0
      %v237 = vsel %vm211, %v184, 0
      %v240 = vsel %vm211, %v185, 0
      %v243 = vsel %vm211, %v186, 0
      %v246 = vsel %vm211, %v187, 0
      %v249 = vsel %vm211, %v188, 0
      %v252 = vsel %vm211, %v189, 0
      %v255 = vsel %vm211, %v190, 0
      %v258 = vsel %vm211, %v191, 0
      %vm260 = vcmask 1045504
      %v262 = vsel %vm260, %v194, 0
      %264 = vmatprep.subr.mxu0 0.0
      %265 = vmatpush1.msra.mxu0 0.0
      %266 = vmatprep.subr.mxu0 0.0
      %267 = vmatpush1.msra.mxu0 0.0
      %268 = vmatprep.subr.mxu0 0.0
      %269 = vmatpush1.msra.mxu0 0.0
      %270 = vmatprep.subr.mxu0 0.0
      %271 = vmatpush1.msra.mxu0 0.0
      %272 = vmatprep.subr.mxu0 0.0
      %273 = vmatpush1.msra.mxu0 0.0
      %274 = vmatprep.subr.mxu0 0.0
      %275 = vmatpush1.msra.mxu0 0.0
      %276 = vmatprep.subr.mxu0 0.0
      %277 = vmatpush1.msra.mxu0 0.0
      %278 = vmatprep.subr.mxu0 0.0
      %279 = vmatpush1.msra.mxu0 0.0
      %280 = vmatprep.subr.mxu0 0.0
      %281 = vmatpush1.msra.mxu0 0.0
      %282 = vmatprep.subr.mxu0 0.0
      %283 = vmatpush1.msra.mxu0 0.0
      %284 = vmatprep.subr.mxu0 0.0
      %285 = vmatpush1.msra.mxu0 0.0
      %286 = vmatprep.subr.mxu0 0.0
      %287 = vmatpush1.msra.mxu0 0.0
      %288 = vmatprep.subr.mxu0 0.0
      %289 = vmatpush1.msra.mxu0 0.0
      %290 = vmatprep.subr.mxu0 0.0
      %291 = vmatpush1.msra.mxu0 0.0
      %292 = vmatprep.subr.mxu0 0.0
      %293 = vmatpush1.msra.mxu0 0.0
      %294 = vmatprep.subr.mxu0 0.0
      %295 = vmatpush1.msra.mxu0 %v262
      %296 = vmatprep.subr.mxu0 0.0
      %297 = vmatpush2.msra.mxu0 0.0
      %298 = vmatprep.subr.mxu0 0.0
      %299 = vmatpush2.msra.mxu0 0.0
      %300 = vmatprep.subr.mxu0 0.0
      %301 = vmatpush2.msra.mxu0 0.0
      %302 = vmatprep.subr.mxu0 0.0
      %303 = vmatpush2.msra.mxu0 0.0
      %304 = vmatprep.subr.mxu0 0.0
      %305 = vmatpush2.msra.mxu0 0.0
      %306 = vmatprep.subr.mxu0 0.0
      %307 = vmatpush2.msra.mxu0 0.0
      %308 = vmatprep.subr.mxu0 0.0
      %309 = vmatpush2.msra.mxu0 0.0
      %310 = vmatprep.subr.mxu0 0.0
      %311 = vmatpush2.msra.mxu0 0.0
      %312 = vmatprep.subr.mxu0 0.0
      %313 = vmatpush2.msra.mxu0 0.0
      %314 = vmatprep.subr.mxu0 0.0
      %315 = vmatpush2.msra.mxu0 0.0
      %316 = vmatprep.subr.mxu0 0.0
      %317 = vmatpush2.msra.mxu0 0.0
      %318 = vmatprep.subr.mxu0 0.0
      %319 = vmatpush2.msra.mxu0 0.0
      %320 = vmatprep.subr.mxu0 0.0
      %321 = vmatpush2.msra.mxu0 0.0
      %322 = vmatprep.subr.mxu0 0.0
      %323 = vmatpush2.msra.mxu0 0.0
      %324 = vmatprep.subr.mxu0 0.0
      %325 = vmatpush2.msra.mxu0 0.0
      %326 = vmatprep.subr.mxu0 0.0
      %327 = vmatpush2.msra.mxu0 0.0
      %328 = vmatprep.mubr.f32.mxu0 0.0
      %329 = vmatmul.mubr.f32.gmra.mxu0 %v213
      %v330 = vpop.f32.mrf.mxu0
      %v331 = vadd.f32 %v210, %v330
      %v332 = vpop.f32.mrf.mxu0
      %333 = vmatprep.mubr.f32.mxu0 0.0
      %334 = vmatmul.mubr.f32.gmra.mxu0 %v216
      %v335 = vpop.f32.mrf.mxu0
      %v336 = vadd.f32 %v210, %v335
      %v337 = vpop.f32.mrf.mxu0
      %338 = vmatprep.mubr.f32.mxu0 0.0
      %339 = vmatmul.mubr.f32.gmra.mxu0 %v219
      %v340 = vpop.f32.mrf.mxu0
      %v341 = vadd.f32 %v210, %v340
      %v342 = vpop.f32.mrf.mxu0
      %343 = vmatprep.mubr.f32.mxu0 0.0
      %344 = vmatmul.mubr.f32.gmra.mxu0 %v222
      %v345 = vpop.f32.mrf.mxu0
      %v346 = vadd.f32 %v210, %v345
      %v347 = vpop.f32.mrf.mxu0
      %348 = vmatprep.mubr.f32.mxu0 0.0
      %349 = vmatmul.mubr.f32.gmra.mxu0 %v225
      %v350 = vpop.f32.mrf.mxu0
      %v351 = vadd.f32 %v210, %v350
      %v352 = vpop.f32.mrf.mxu0
      %353 = vmatprep.mubr.f32.mxu0 0.0
      %354 = vmatmul.mubr.f32.gmra.mxu0 %v228
      %v355 = vpop.f32.mrf.mxu0
      %v356 = vadd.f32 %v210, %v355
      %v357 = vpop.f32.mrf.mxu0
      %358 = vmatprep.mubr.f32.mxu0 0.0
      %359 = vmatmul.mubr.f32.gmra.mxu0 %v231
      %v360 = vpop.f32.mrf.mxu0
      %v361 = vadd.f32 %v210, %v360
      %v362 = vpop.f32.mrf.mxu0
      %363 = vmatprep.mubr.f32.mxu0 0.0
      %364 = vmatmul.mubr.f32.gmra.mxu0 %v234
      %v365 = vpop.f32.mrf.mxu0
      %v366 = vadd.f32 %v210, %v365
      %v367 = vpop.f32.mrf.mxu0
      %368 = vmatprep.mubr.f32.mxu0 0.0
      %369 = vmatmul.mubr.f32.gmra.mxu0 %v237
      %v370 = vpop.f32.mrf.mxu0
      %v371 = vadd.f32 %v210, %v370
      %v372 = vpop.f32.mrf.mxu0
      %373 = vmatprep.mubr.f32.mxu0 0.0
      %374 = vmatmul.mubr.f32.gmra.mxu0 %v240
      %v375 = vpop.f32.mrf.mxu0
      %v376 = vadd.f32 %v210, %v375
      %v377 = vpop.f32.mrf.mxu0
      %378 = vmatprep.mubr.f32.mxu0 0.0
      %379 = vmatmul.mubr.f32.gmra.mxu0 %v243
      %v380 = vpop.f32.mrf.mxu0
      %v381 = vadd.f32 %v210, %v380
      %v382 = vpop.f32.mrf.mxu0
      %383 = vmatprep.mubr.f32.mxu0 0.0
      %384 = vmatmul.mubr.f32.gmra.mxu0 %v246
      %v385 = vpop.f32.mrf.mxu0
      %v386 = vadd.f32 %v210, %v385
      %v387 = vpop.f32.mrf.mxu0
      %388 = vmatprep.mubr.f32.mxu0 0.0
      %389 = vmatmul.mubr.f32.gmra.mxu0 %v249
      %v390 = vpop.f32.mrf.mxu0
      %v391 = vadd.f32 %v210, %v390
      %v392 = vpop.f32.mrf.mxu0
      %393 = vmatprep.mubr.f32.mxu0 0.0
      %394 = vmatmul.mubr.f32.gmra.mxu0 %v252
      %v395 = vpop.f32.mrf.mxu0
      %v396 = vadd.f32 %v210, %v395
      %v397 = vpop.f32.mrf.mxu0
      %398 = vmatprep.mubr.f32.mxu0 0.0
      %399 = vmatmul.mubr.f32.gmra.mxu0 %v255
      %v400 = vpop.f32.mrf.mxu0
      %v401 = vadd.f32 %v210, %v400
      %v402 = vpop.f32.mrf.mxu0
      %403 = vmatprep.mubr.f32.mxu0 0.0
      %404 = vmatmul.mubr.f32.gmra.mxu0 %v258
      %v405 = vpop.f32.mrf.mxu0
      %v406 = vadd.f32 %v210, %v405
      %v407 = vpop.f32.mrf.mxu0
      %408 = vdwg.mxu0
      %s409 = smul.u32 %s30, 128
      %s410 = sld [smem:[#allocation3 + %s409]]
      %s411 = sld [smem:[#allocation4 + %s409]]
      %v412 = vstv %s410
      %vm413 = vcmp.lt.s32.totalorder %v193, %v412
      %v414 = vsel %vm413, 1, 0
      %vm415 = vcmp.eq.s32.totalorder %v414, 1
      %v416 = vsel %vm415, %v331, 0.0
      %v417 = vsel %vm415, %v336, 0.0
      %v418 = vsel %vm415, %v341, 0.0
      %v419 = vsel %vm415, %v346, 0.0
      %v420 = vsel %vm415, %v351, 0.0
      %v421 = vsel %vm415, %v356, 0.0
      %v422 = vsel %vm415, %v361, 0.0
      %v423 = vsel %vm415, %v366, 0.0
      %v424 = vsel %vm415, %v371, 0.0
      %v425 = vsel %vm415, %v376, 0.0
      %v426 = vsel %vm415, %v381, 0.0
      %v427 = vsel %vm415, %v386, 0.0
      %v428 = vsel %vm415, %v391, 0.0
      %v429 = vsel %vm415, %v396, 0.0
      %v430 = vsel %vm415, %v401, 0.0
      %v431 = vsel %vm415, %v406, 0.0
      %vm432 = vcmask 523264
      %v434 = vsel %vm432, %v416, 0
      %v437 = vsel %vm432, %v417, 0
      %v440 = vsel %vm432, %v418, 0
      %v443 = vsel %vm432, %v419, 0
      %v446 = vsel %vm432, %v420, 0
      %v449 = vsel %vm432, %v421, 0
      %v452 = vsel %vm432, %v422, 0
      %v455 = vsel %vm432, %v423, 0
      %v458 = vsel %vm432, %v424, 0
      %v461 = vsel %vm432, %v425, 0
      %v464 = vsel %vm432, %v426, 0
      %v467 = vsel %vm432, %v427, 0
      %v470 = vsel %vm432, %v428, 0
      %v473 = vsel %vm432, %v429, 0
      %v476 = vsel %vm432, %v430, 0
      %v479 = vsel %vm432, %v431, 0
      %481 = vmatprep.subr.mxu0 0.0
      %482 = vmatpush1.msra.mxu0 0.0
      %483 = vmatprep.subr.mxu0 0.0
      %484 = vmatpush1.msra.mxu0 0.0
      %485 = vmatprep.subr.mxu0 0.0
      %486 = vmatpush1.msra.mxu0 0.0
      %487 = vmatprep.subr.mxu0 0.0
      %488 = vmatpush1.msra.mxu0 0.0
      %489 = vmatprep.subr.mxu0 0.0
      %490 = vmatpush1.msra.mxu0 0.0
      %491 = vmatprep.subr.mxu0 0.0
      %492 = vmatpush1.msra.mxu0 0.0
      %493 = vmatprep.subr.mxu0 0.0
      %494 = vmatpush1.msra.mxu0 0.0
      %495 = vmatprep.subr.mxu0 0.0
      %496 = vmatpush1.msra.mxu0 0.0
      %497 = vmatprep.subr.mxu0 0.0
      %498 = vmatpush1.msra.mxu0 1.0
      %499 = vmatprep.subr.mxu0 0.0
      %500 = vmatpush1.msra.mxu0 1.0
      %501 = vmatprep.subr.mxu0 0.0
      %502 = vmatpush1.msra.mxu0 1.0
      %503 = vmatprep.subr.mxu0 0.0
      %504 = vmatpush1.msra.mxu0 1.0
      %505 = vmatprep.subr.mxu0 0.0
      %506 = vmatpush1.msra.mxu0 1.0
      %507 = vmatprep.subr.mxu0 0.0
      %508 = vmatpush1.msra.mxu0 1.0
      %509 = vmatprep.subr.mxu0 0.0
      %510 = vmatpush1.msra.mxu0 1.0
      %511 = vmatprep.subr.mxu0 0.0
      %512 = vmatpush1.msra.mxu0 1.0
      %513 = vmatprep.subr.mxu0 0.0
      %514 = vmatpush2.msra.mxu0 0.0
      %515 = vmatprep.subr.mxu0 0.0
      %516 = vmatpush2.msra.mxu0 0.0
      %517 = vmatprep.subr.mxu0 0.0
      %518 = vmatpush2.msra.mxu0 0.0
      %519 = vmatprep.subr.mxu0 0.0
      %520 = vmatpush2.msra.mxu0 0.0
      %521 = vmatprep.subr.mxu0 0.0
      %522 = vmatpush2.msra.mxu0 0.0
      %523 = vmatprep.subr.mxu0 0.0
      %524 = vmatpush2.msra.mxu0 0.0
      %525 = vmatprep.subr.mxu0 0.0
      %526 = vmatpush2.msra.mxu0 0.0
      %527 = vmatprep.subr.mxu0 0.0
      %528 = vmatpush2.msra.mxu0 0.0
      %529 = vmatprep.subr.mxu0 0.0
      %530 = vmatpush2.msra.mxu0 0.0
      %531 = vmatprep.subr.mxu0 0.0
      %532 = vmatpush2.msra.mxu0 0.0
      %533 = vmatprep.subr.mxu0 0.0
      %534 = vmatpush2.msra.mxu0 0.0
      %535 = vmatprep.subr.mxu0 0.0
      %536 = vmatpush2.msra.mxu0 0.0
      %537 = vmatprep.subr.mxu0 0.0
      %538 = vmatpush2.msra.mxu0 0.0
      %539 = vmatprep.subr.mxu0 0.0
      %540 = vmatpush2.msra.mxu0 0.0
      %541 = vmatprep.subr.mxu0 0.0
      %542 = vmatpush2.msra.mxu0 0.0
      %543 = vmatprep.subr.mxu0 0.0
      %544 = vmatpush2.msra.mxu0 0.0
      %545 = vmatprep.mubr.f32.mxu0 0.0
      %546 = vmatmul.mubr.f32.gmra.mxu0 %v434
      %v547 = vpop.f32.mrf.mxu0
      %v548 = vadd.f32 0.0, %v547
      %v549 = vpop.f32.mrf.mxu0
      %550 = vmatprep.mubr.f32.mxu0 0.0
      %551 = vmatmul.mubr.f32.gmra.mxu0 %v437
      %v552 = vpop.f32.mrf.mxu0
      %v553 = vadd.f32 0.0, %v552
      %v554 = vpop.f32.mrf.mxu0
      %555 = vmatprep.mubr.f32.mxu0 0.0
      %556 = vmatmul.mubr.f32.gmra.mxu0 %v440
      %v557 = vpop.f32.mrf.mxu0
      %v558 = vadd.f32 0.0, %v557
      %v559 = vpop.f32.mrf.mxu0
      %560 = vmatprep.mubr.f32.mxu0 0.0
      %561 = vmatmul.mubr.f32.gmra.mxu0 %v443
      %v562 = vpop.f32.mrf.mxu0
      %v563 = vadd.f32 0.0, %v562
      %v564 = vpop.f32.mrf.mxu0
      %565 = vmatprep.mubr.f32.mxu0 0.0
      %566 = vmatmul.mubr.f32.gmra.mxu0 %v446
      %v567 = vpop.f32.mrf.mxu0
      %v568 = vadd.f32 0.0, %v567
      %v569 = vpop.f32.mrf.mxu0
      %570 = vmatprep.mubr.f32.mxu0 0.0
      %571 = vmatmul.mubr.f32.gmra.mxu0 %v449
      %v572 = vpop.f32.mrf.mxu0
      %v573 = vadd.f32 0.0, %v572
      %v574 = vpop.f32.mrf.mxu0
      %575 = vmatprep.mubr.f32.mxu0 0.0
      %576 = vmatmul.mubr.f32.gmra.mxu0 %v452
      %v577 = vpop.f32.mrf.mxu0
      %v578 = vadd.f32 0.0, %v577
      %v579 = vpop.f32.mrf.mxu0
      %580 = vmatprep.mubr.f32.mxu0 0.0
      %581 = vmatmul.mubr.f32.gmra.mxu0 %v455
      %v582 = vpop.f32.mrf.mxu0
      %v583 = vadd.f32 0.0, %v582
      %v584 = vpop.f32.mrf.mxu0
      %585 = vmatprep.mubr.f32.mxu0 0.0
      %586 = vmatmul.mubr.f32.gmra.mxu0 %v458
      %v587 = vpop.f32.mrf.mxu0
      %v588 = vadd.f32 0.0, %v587
      %v589 = vpop.f32.mrf.mxu0
      %590 = vmatprep.mubr.f32.mxu0 0.0
      %591 = vmatmul.mubr.f32.gmra.mxu0 %v461
      %v592 = vpop.f32.mrf.mxu0
      %v593 = vadd.f32 0.0, %v592
      %v594 = vpop.f32.mrf.mxu0
      %595 = vmatprep.mubr.f32.mxu0 0.0
      %596 = vmatmul.mubr.f32.gmra.mxu0 %v464
      %v597 = vpop.f32.mrf.mxu0
      %v598 = vadd.f32 0.0, %v597
      %v599 = vpop.f32.mrf.mxu0
      %600 = vmatprep.mubr.f32.mxu0 0.0
      %601 = vmatmul.mubr.f32.gmra.mxu0 %v467
      %v602 = vpop.f32.mrf.mxu0
      %v603 = vadd.f32 0.0, %v602
      %v604 = vpop.f32.mrf.mxu0
      %605 = vmatprep.mubr.f32.mxu0 0.0
      %606 = vmatmul.mubr.f32.gmra.mxu0 %v470
      %v607 = vpop.f32.mrf.mxu0
      %v608 = vadd.f32 0.0, %v607
      %v609 = vpop.f32.mrf.mxu0
      %610 = vmatprep.mubr.f32.mxu0 0.0
      %611 = vmatmul.mubr.f32.gmra.mxu0 %v473
      %v612 = vpop.f32.mrf.mxu0
      %v613 = vadd.f32 0.0, %v612
      %v614 = vpop.f32.mrf.mxu0
      %615 = vmatprep.mubr.f32.mxu0 0.0
      %616 = vmatmul.mubr.f32.gmra.mxu0 %v476
      %v617 = vpop.f32.mrf.mxu0
      %v618 = vadd.f32 0.0, %v617
      %v619 = vpop.f32.mrf.mxu0
      %620 = vmatprep.mubr.f32.mxu0 0.0
      %621 = vmatmul.mubr.f32.gmra.mxu0 %v479
      %v622 = vpop.f32.mrf.mxu0
      %v623 = vadd.f32 0.0, %v622
      %v624 = vpop.f32.mrf.mxu0
      %625 = vdwg.mxu0
      %v626 = vstv %s411
      %v627 = vmul.f32 %v548, %v626
      %v628 = vmul.f32 %v553, %v626
      %v629 = vmul.f32 %v558, %v626
      %v630 = vmul.f32 %v563, %v626
      %v631 = vmul.f32 %v568, %v626
      %v632 = vmul.f32 %v573, %v626
      %v633 = vmul.f32 %v578, %v626
      %v634 = vmul.f32 %v583, %v626
      %v635 = vmul.f32 %v588, %v626
      %v636 = vmul.f32 %v593, %v626
      %v637 = vmul.f32 %v598, %v626
      %v638 = vmul.f32 %v603, %v626
      %v639 = vmul.f32 %v608, %v626
      %v640 = vmul.f32 %v613, %v626
      %v641 = vmul.f32 %v618, %v626
      %v642 = vmul.f32 %v623, %v626
      %644 = vset.pattern.permute.xlu0 0
      %645 = vperm.xlu0 %644, %v627
      %v646 = vpop.permute.xlu0 %645
      %649 = vset.pattern.permute.xlu0 0
      %650 = vperm.xlu0 %649, %v628
      %v651 = vpop.permute.xlu0 %650
      %654 = vset.pattern.permute.xlu0 0
      %655 = vperm.xlu0 %654, %v629
      %v656 = vpop.permute.xlu0 %655
      %659 = vset.pattern.permute.xlu0 0
      %660 = vperm.xlu0 %659, %v630
      %v661 = vpop.permute.xlu0 %660
      %664 = vset.pattern.permute.xlu0 0
      %665 = vperm.xlu0 %664, %v631
      %v666 = vpop.permute.xlu0 %665
      %669 = vset.pattern.permute.xlu0 0
      %670 = vperm.xlu0 %669, %v632
      %v671 = vpop.permute.xlu0 %670
      %674 = vset.pattern.permute.xlu0 0
      %675 = vperm.xlu0 %674, %v633
      %v676 = vpop.permute.xlu0 %675
      %679 = vset.pattern.permute.xlu0 0
      %680 = vperm.xlu0 %679, %v634
      %v681 = vpop.permute.xlu0 %680
      %684 = vset.pattern.permute.xlu0 0
      %685 = vperm.xlu0 %684, %v635
      %v686 = vpop.permute.xlu0 %685
      %689 = vset.pattern.permute.xlu0 0
      %690 = vperm.xlu0 %689, %v636
      %v691 = vpop.permute.xlu0 %690
      %694 = vset.pattern.permute.xlu0 0
      %695 = vperm.xlu0 %694, %v637
      %v696 = vpop.permute.xlu0 %695
      %699 = vset.pattern.permute.xlu0 0
      %700 = vperm.xlu0 %699, %v638
      %v701 = vpop.permute.xlu0 %700
      %704 = vset.pattern.permute.xlu0 0
      %705 = vperm.xlu0 %704, %v639
      %v706 = vpop.permute.xlu0 %705
      %709 = vset.pattern.permute.xlu0 0
      %710 = vperm.xlu0 %709, %v640
      %v711 = vpop.permute.xlu0 %710
      %714 = vset.pattern.permute.xlu0 0
      %715 = vperm.xlu0 %714, %v641
      %v716 = vpop.permute.xlu0 %715
      %719 = vset.pattern.permute.xlu0 0
      %720 = vperm.xlu0 %719, %v642
      %v721 = vpop.permute.xlu0 %720
      %v723 = vsub.f32 %v416, %v646
      %v724 = vsub.f32 %v417, %v651
      %v725 = vsub.f32 %v418, %v656
      %v726 = vsub.f32 %v419, %v661
      %v727 = vsub.f32 %v420, %v666
      %v728 = vsub.f32 %v421, %v671
      %v729 = vsub.f32 %v422, %v676
      %v730 = vsub.f32 %v423, %v681
      %v731 = vsub.f32 %v424, %v686
      %v732 = vsub.f32 %v425, %v691
      %v733 = vsub.f32 %v426, %v696
      %v734 = vsub.f32 %v427, %v701
      %v735 = vsub.f32 %v428, %v706
      %v736 = vsub.f32 %v429, %v711
      %v737 = vsub.f32 %v430, %v716
      %v738 = vsub.f32 %v431, %v721
      %v739 = vsel %vm415, %v723, 0.0
      %v740 = vsel %vm415, %v724, 0.0
      %v741 = vsel %vm415, %v725, 0.0
      %v742 = vsel %vm415, %v726, 0.0
      %v743 = vsel %vm415, %v727, 0.0
      %v744 = vsel %vm415, %v728, 0.0
      %v745 = vsel %vm415, %v729, 0.0
      %v746 = vsel %vm415, %v730, 0.0
      %v747 = vsel %vm415, %v731, 0.0
      %v748 = vsel %vm415, %v732, 0.0
      %v749 = vsel %vm415, %v733, 0.0
      %v750 = vsel %vm415, %v734, 0.0
      %v751 = vsel %vm415, %v735, 0.0
      %v752 = vsel %vm415, %v736, 0.0
      %v753 = vsel %vm415, %v737, 0.0
      %v754 = vsel %vm415, %v738, 0.0
      %v755 = vmul.f32 %v739, %v739
      %v756 = vmul.f32 %v740, %v740
      %v757 = vmul.f32 %v741, %v741
      %v758 = vmul.f32 %v742, %v742
      %v759 = vmul.f32 %v743, %v743
      %v760 = vmul.f32 %v744, %v744
      %v761 = vmul.f32 %v745, %v745
      %v762 = vmul.f32 %v746, %v746
      %v763 = vmul.f32 %v747, %v747
      %v764 = vmul.f32 %v748, %v748
      %v765 = vmul.f32 %v749, %v749
      %v766 = vmul.f32 %v750, %v750
      %v767 = vmul.f32 %v751, %v751
      %v768 = vmul.f32 %v752, %v752
      %v769 = vmul.f32 %v753, %v753
      %v770 = vmul.f32 %v754, %v754
      %v772 = vsel %vm432, %v755, 0
      %v775 = vsel %vm432, %v756, 0
      %v778 = vsel %vm432, %v757, 0
      %v781 = vsel %vm432, %v758, 0
      %v784 = vsel %vm432, %v759, 0
      %v787 = vsel %vm432, %v760, 0
      %v790 = vsel %vm432, %v761, 0
      %v793 = vsel %vm432, %v762, 0
      %v796 = vsel %vm432, %v763, 0
      %v799 = vsel %vm432, %v764, 0
      %v802 = vsel %vm432, %v765, 0
      %v805 = vsel %vm432, %v766, 0
      %v808 = vsel %vm432, %v767, 0
      %v811 = vsel %vm432, %v768, 0
      %v814 = vsel %vm432, %v769, 0
      %v817 = vsel %vm432, %v770, 0
      %819 = vmatprep.subr.mxu0 0.0
      %820 = vmatpush1.msra.mxu0 0.0
      %821 = vmatprep.subr.mxu0 0.0
      %822 = vmatpush1.msra.mxu0 0.0
      %823 = vmatprep.subr.mxu0 0.0
      %824 = vmatpush1.msra.mxu0 0.0
      %825 = vmatprep.subr.mxu0 0.0
      %826 = vmatpush1.msra.mxu0 0.0
      %827 = vmatprep.subr.mxu0 0.0
      %828 = vmatpush1.msra.mxu0 0.0
      %829 = vmatprep.subr.mxu0 0.0
      %830 = vmatpush1.msra.mxu0 0.0
      %831 = vmatprep.subr.mxu0 0.0
      %832 = vmatpush1.msra.mxu0 0.0
      %833 = vmatprep.subr.mxu0 0.0
      %834 = vmatpush1.msra.mxu0 0.0
      %835 = vmatprep.subr.mxu0 0.0
      %836 = vmatpush1.msra.mxu0 1.0
      %837 = vmatprep.subr.mxu0 0.0
      %838 = vmatpush1.msra.mxu0 1.0
      %839 = vmatprep.subr.mxu0 0.0
      %840 = vmatpush1.msra.mxu0 1.0
      %841 = vmatprep.subr.mxu0 0.0
      %842 = vmatpush1.msra.mxu0 1.0
      %843 = vmatprep.subr.mxu0 0.0
      %844 = vmatpush1.msra.mxu0 1.0
      %845 = vmatprep.subr.mxu0 0.0
      %846 = vmatpush1.msra.mxu0 1.0
      %847 = vmatprep.subr.mxu0 0.0
      %848 = vmatpush1.msra.mxu0 1.0
      %849 = vmatprep.subr.mxu0 0.0
      %850 = vmatpush1.msra.mxu0 1.0
      %851 = vmatprep.subr.mxu0 0.0
      %852 = vmatpush2.msra.mxu0 0.0
      %853 = vmatprep.subr.mxu0 0.0
      %854 = vmatpush2.msra.mxu0 0.0
      %855 = vmatprep.subr.mxu0 0.0
      %856 = vmatpush2.msra.mxu0 0.0
      %857 = vmatprep.subr.mxu0 0.0
      %858 = vmatpush2.msra.mxu0 0.0
      %859 = vmatprep.subr.mxu0 0.0
      %860 = vmatpush2.msra.mxu0 0.0
      %861 = vmatprep.subr.mxu0 0.0
      %862 = vmatpush2.msra.mxu0 0.0
      %863 = vmatprep.subr.mxu0 0.0
      %864 = vmatpush2.msra.mxu0 0.0
      %865 = vmatprep.subr.mxu0 0.0
      %866 = vmatpush2.msra.mxu0 0.0
      %867 = vmatprep.subr.mxu0 0.0
      %868 = vmatpush2.msra.mxu0 0.0
      %869 = vmatprep.subr.mxu0 0.0
      %870 = vmatpush2.msra.mxu0 0.0
      %871 = vmatprep.subr.mxu0 0.0
      %872 = vmatpush2.msra.mxu0 0.0
      %873 = vmatprep.subr.mxu0 0.0
      %874 = vmatpush2.msra.mxu0 0.0
      %875 = vmatprep.subr.mxu0 0.0
      %876 = vmatpush2.msra.mxu0 0.0
      %877 = vmatprep.subr.mxu0 0.0
      %878 = vmatpush2.msra.mxu0 0.0
      %879 = vmatprep.subr.mxu0 0.0
      %880 = vmatpush2.msra.mxu0 0.0
      %881 = vmatprep.subr.mxu0 0.0
      %882 = vmatpush2.msra.mxu0 0.0
      %883 = vmatprep.mubr.f32.mxu0 0.0
      %884 = vmatmul.mubr.f32.gmra.mxu0 %v772
      %v885 = vpop.f32.mrf.mxu0
      %v886 = vadd.f32 0.0, %v885
      %v887 = vpop.f32.mrf.mxu0
      %888 = vmatprep.mubr.f32.mxu0 0.0
      %889 = vmatmul.mubr.f32.gmra.mxu0 %v775
      %v890 = vpop.f32.mrf.mxu0
      %v891 = vadd.f32 0.0, %v890
      %v892 = vpop.f32.mrf.mxu0
      %893 = vmatprep.mubr.f32.mxu0 0.0
      %894 = vmatmul.mubr.f32.gmra.mxu0 %v778
      %v895 = vpop.f32.mrf.mxu0
      %v896 = vadd.f32 0.0, %v895
      %v897 = vpop.f32.mrf.mxu0
      %898 = vmatprep.mubr.f32.mxu0 0.0
      %899 = vmatmul.mubr.f32.gmra.mxu0 %v781
      %v900 = vpop.f32.mrf.mxu0
      %v901 = vadd.f32 0.0, %v900
      %v902 = vpop.f32.mrf.mxu0
      %903 = vmatprep.mubr.f32.mxu0 0.0
      %904 = vmatmul.mubr.f32.gmra.mxu0 %v784
      %v905 = vpop.f32.mrf.mxu0
      %v906 = vadd.f32 0.0, %v905
      %v907 = vpop.f32.mrf.mxu0
      %908 = vmatprep.mubr.f32.mxu0 0.0
      %909 = vmatmul.mubr.f32.gmra.mxu0 %v787
      %v910 = vpop.f32.mrf.mxu0
      %v911 = vadd.f32 0.0, %v910
      %v912 = vpop.f32.mrf.mxu0
      %913 = vmatprep.mubr.f32.mxu0 0.0
      %914 = vmatmul.mubr.f32.gmra.mxu0 %v790
      %v915 = vpop.f32.mrf.mxu0
      %v916 = vadd.f32 0.0, %v915
      %v917 = vpop.f32.mrf.mxu0
      %918 = vmatprep.mubr.f32.mxu0 0.0
      %919 = vmatmul.mubr.f32.gmra.mxu0 %v793
      %v920 = vpop.f32.mrf.mxu0
      %v921 = vadd.f32 0.0, %v920
      %v922 = vpop.f32.mrf.mxu0
      %923 = vmatprep.mubr.f32.mxu0 0.0
      %924 = vmatmul.mubr.f32.gmra.mxu0 %v796
      %v925 = vpop.f32.mrf.mxu0
      %v926 = vadd.f32 0.0, %v925
      %v927 = vpop.f32.mrf.mxu0
      %928 = vmatprep.mubr.f32.mxu0 0.0
      %929 = vmatmul.mubr.f32.gmra.mxu0 %v799
      %v930 = vpop.f32.mrf.mxu0
      %v931 = vadd.f32 0.0, %v930
      %v932 = vpop.f32.mrf.mxu0
      %933 = vmatprep.mubr.f32.mxu0 0.0
      %934 = vmatmul.mubr.f32.gmra.mxu0 %v802
      %v935 = vpop.f32.mrf.mxu0
      %v936 = vadd.f32 0.0, %v935
      %v937 = vpop.f32.mrf.mxu0
      %938 = vmatprep.mubr.f32.mxu0 0.0
      %939 = vmatmul.mubr.f32.gmra.mxu0 %v805
      %v940 = vpop.f32.mrf.mxu0
      %v941 = vadd.f32 0.0, %v940
      %v942 = vpop.f32.mrf.mxu0
      %943 = vmatprep.mubr.f32.mxu0 0.0
      %944 = vmatmul.mubr.f32.gmra.mxu0 %v808
      %v945 = vpop.f32.mrf.mxu0
      %v946 = vadd.f32 0.0, %v945
      %v947 = vpop.f32.mrf.mxu0
      %948 = vmatprep.mubr.f32.mxu0 0.0
      %949 = vmatmul.mubr.f32.gmra.mxu0 %v811
      %v950 = vpop.f32.mrf.mxu0
      %v951 = vadd.f32 0.0, %v950
      %v952 = vpop.f32.mrf.mxu0
      %953 = vmatprep.mubr.f32.mxu0 0.0
      %954 = vmatmul.mubr.f32.gmra.mxu0 %v814
      %v955 = vpop.f32.mrf.mxu0
      %v956 = vadd.f32 0.0, %v955
      %v957 = vpop.f32.mrf.mxu0
      %958 = vmatprep.mubr.f32.mxu0 0.0
      %959 = vmatmul.mubr.f32.gmra.mxu0 %v817
      %v960 = vpop.f32.mrf.mxu0
      %v961 = vadd.f32 0.0, %v960
      %v962 = vpop.f32.mrf.mxu0
      %963 = vdwg.mxu0
      %v964 = vmul.f32 %v886, %v626
      %v965 = vmul.f32 %v891, %v626
      %v966 = vmul.f32 %v896, %v626
      %v967 = vmul.f32 %v901, %v626
      %v968 = vmul.f32 %v906, %v626
      %v969 = vmul.f32 %v911, %v626
      %v970 = vmul.f32 %v916, %v626
      %v971 = vmul.f32 %v921, %v626
      %v972 = vmul.f32 %v926, %v626
      %v973 = vmul.f32 %v931, %v626
      %v974 = vmul.f32 %v936, %v626
      %v975 = vmul.f32 %v941, %v626
      %v976 = vmul.f32 %v946, %v626
      %v977 = vmul.f32 %v951, %v626
      %v978 = vmul.f32 %v956, %v626
      %v979 = vmul.f32 %v961, %v626
      %v980 = vadd.f32 %v964, 1e-05
      %v981 = vadd.f32 %v965, 1e-05
      %v982 = vadd.f32 %v966, 1e-05
      %v983 = vadd.f32 %v967, 1e-05
      %v984 = vadd.f32 %v968, 1e-05
      %v985 = vadd.f32 %v969, 1e-05
      %v986 = vadd.f32 %v970, 1e-05
      %v987 = vadd.f32 %v971, 1e-05
      %v988 = vadd.f32 %v972, 1e-05
      %v989 = vadd.f32 %v973, 1e-05
      %v990 = vadd.f32 %v974, 1e-05
      %v991 = vadd.f32 %v975, 1e-05
      %v992 = vadd.f32 %v976, 1e-05
      %v993 = vadd.f32 %v977, 1e-05
      %v994 = vadd.f32 %v978, 1e-05
      %v995 = vadd.f32 %v979, 1e-05
      %v996 = vrsqrt.pop %v980
      %v997 = vrsqrt.pop %v981
      %v998 = vrsqrt.pop %v982
      %v999 = vrsqrt.pop %v983
      %v1000 = vrsqrt.pop %v984
      %v1001 = vrsqrt.pop %v985
      %v1002 = vrsqrt.pop %v986
      %v1003 = vrsqrt.pop %v987
      %v1004 = vrsqrt.pop %v988
      %v1005 = vrsqrt.pop %v989
      %v1006 = vrsqrt.pop %v990
      %v1007 = vrsqrt.pop %v991
      %v1008 = vrsqrt.pop %v992
      %v1009 = vrsqrt.pop %v993
      %v1010 = vrsqrt.pop %v994
      %v1011 = vrsqrt.pop %v995
      %1013 = vset.pattern.permute.xlu0 0
      %1014 = vperm.xlu0 %1013, %v996
      %v1015 = vpop.permute.xlu0 %1014
      %1018 = vset.pattern.permute.xlu0 0
      %1019 = vperm.xlu0 %1018, %v997
      %v1020 = vpop.permute.xlu0 %1019
      %1023 = vset.pattern.permute.xlu0 0
      %1024 = vperm.xlu0 %1023, %v998
      %v1025 = vpop.permute.xlu0 %1024
      %1028 = vset.pattern.permute.xlu0 0
      %1029 = vperm.xlu0 %1028, %v999
      %v1030 = vpop.permute.xlu0 %1029
      %1033 = vset.pattern.permute.xlu0 0
      %1034 = vperm.xlu0 %1033, %v1000
      %v1035 = vpop.permute.xlu0 %1034
      %1038 = vset.pattern.permute.xlu0 0
      %1039 = vperm.xlu0 %1038, %v1001
      %v1040 = vpop.permute.xlu0 %1039
      %1043 = vset.pattern.permute.xlu0 0
      %1044 = vperm.xlu0 %1043, %v1002
      %v1045 = vpop.permute.xlu0 %1044
      %1048 = vset.pattern.permute.xlu0 0
      %1049 = vperm.xlu0 %1048, %v1003
      %v1050 = vpop.permute.xlu0 %1049
      %1053 = vset.pattern.permute.xlu0 0
      %1054 = vperm.xlu0 %1053, %v1004
      %v1055 = vpop.permute.xlu0 %1054
      %1058 = vset.pattern.permute.xlu0 0
      %1059 = vperm.xlu0 %1058, %v1005
      %v1060 = vpop.permute.xlu0 %1059
      %1063 = vset.pattern.permute.xlu0 0
      %1064 = vperm.xlu0 %1063, %v1006
      %v1065 = vpop.permute.xlu0 %1064
      %1068 = vset.pattern.permute.xlu0 0
      %1069 = vperm.xlu0 %1068, %v1007
      %v1070 = vpop.permute.xlu0 %1069
      %1073 = vset.pattern.permute.xlu0 0
      %1074 = vperm.xlu0 %1073, %v1008
      %v1075 = vpop.permute.xlu0 %1074
      %1078 = vset.pattern.permute.xlu0 0
      %1079 = vperm.xlu0 %1078, %v1009
      %v1080 = vpop.permute.xlu0 %1079
      %1083 = vset.pattern.permute.xlu0 0
      %1084 = vperm.xlu0 %1083, %v1010
      %v1085 = vpop.permute.xlu0 %1084
      %1088 = vset.pattern.permute.xlu0 0
      %1089 = vperm.xlu0 %1088, %v1011
      %v1090 = vpop.permute.xlu0 %1089
      %v1092 = vmul.f32 %v739, %v1015
      %v1093 = vmul.f32 %v740, %v1020
      %v1094 = vmul.f32 %v741, %v1025
      %v1095 = vmul.f32 %v742, %v1030
      %v1096 = vmul.f32 %v743, %v1035
      %v1097 = vmul.f32 %v744, %v1040
      %v1098 = vmul.f32 %v745, %v1045
      %v1099 = vmul.f32 %v746, %v1050
      %v1100 = vmul.f32 %v747, %v1055
      %v1101 = vmul.f32 %v748, %v1060
      %v1102 = vmul.f32 %v749, %v1065
      %v1103 = vmul.f32 %v750, %v1070
      %v1104 = vmul.f32 %v751, %v1075
      %v1105 = vmul.f32 %v752, %v1080
      %v1106 = vmul.f32 %v753, %v1085
      %v1107 = vmul.f32 %v754, %v1090
      %v1108 = vld [vmem:[%s3 + $0x10] sm:$0x1]
      %v1109 = vld [vmem:[%s3 + $0x18] sm:$0x1]
      %v1110 = vlaneseq
      %v1111 = vshrl.u32 %v1110, 7
      %v1112 = vsub.s32 0, %v1111
      %v1113 = vrot.slane %v1108, %v1112
      %v1114 = vmul.f32 %v1113, %v1092
      %v1115 = vmul.f32 %v1113, %v1093
      %v1116 = vmul.f32 %v1113, %v1094
      %v1117 = vmul.f32 %v1113, %v1095
      %v1118 = vmul.f32 %v1113, %v1096
      %v1119 = vmul.f32 %v1113, %v1097
      %v1120 = vmul.f32 %v1113, %v1098
      %v1121 = vmul.f32 %v1113, %v1099
      %v1122 = vmul.f32 %v1113, %v1100
      %v1123 = vmul.f32 %v1113, %v1101
      %v1124 = vmul.f32 %v1113, %v1102
      %v1125 = vmul.f32 %v1113, %v1103
      %v1126 = vmul.f32 %v1113, %v1104
      %v1127 = vmul.f32 %v1113, %v1105
      %v1128 = vmul.f32 %v1113, %v1106
      %v1129 = vmul.f32 %v1113, %v1107
      %v1130 = vlaneseq
      %v1131 = vshrl.u32 %v1130, 7
      %v1132 = vsub.s32 0, %v1131
      %v1133 = vrot.slane %v1109, %v1132
      %v1134 = vadd.f32 %v1114, %v1133
      %v1135 = vadd.f32 %v1115, %v1133
      %v1136 = vadd.f32 %v1116, %v1133
      %v1137 = vadd.f32 %v1117, %v1133
      %v1138 = vadd.f32 %v1118, %v1133
      %v1139 = vadd.f32 %v1119, %v1133
      %v1140 = vadd.f32 %v1120, %v1133
      %v1141 = vadd.f32 %v1121, %v1133
      %v1142 = vadd.f32 %v1122, %v1133
      %v1143 = vadd.f32 %v1123, %v1133
      %v1144 = vadd.f32 %v1124, %v1133
      %v1145 = vadd.f32 %v1125, %v1133
      %v1146 = vadd.f32 %v1126, %v1133
      %v1147 = vadd.f32 %v1127, %v1133
      %v1148 = vadd.f32 %v1128, %v1133
      %v1149 = vadd.f32 %v1129, %v1133
      %v1150 = vsel %vm415, %v1134, 0.0
      %v1151 = vsel %vm415, %v1135, 0.0
      %v1152 = vsel %vm415, %v1136, 0.0
      %v1153 = vsel %vm415, %v1137, 0.0
      %v1154 = vsel %vm415, %v1138, 0.0
      %v1155 = vsel %vm415, %v1139, 0.0
      %v1156 = vsel %vm415, %v1140, 0.0
      %v1157 = vsel %vm415, %v1141, 0.0
      %v1158 = vsel %vm415, %v1142, 0.0
      %v1159 = vsel %vm415, %v1143, 0.0
      %v1160 = vsel %vm415, %v1144, 0.0
      %v1161 = vsel %vm415, %v1145, 0.0
      %v1162 = vsel %vm415, %v1146, 0.0
      %v1163 = vsel %vm415, %v1147, 0.0
      %v1164 = vsel %vm415, %v1148, 0.0
      %v1165 = vsel %vm415, %v1149, 0.0
      %v1166 = vmax.f32 %v1150, 0.0
      %v1167 = vmax.f32 %v1151, 0.0
      %v1168 = vmax.f32 %v1152, 0.0
      %v1169 = vmax.f32 %v1153, 0.0
      %v1170 = vmax.f32 %v1154, 0.0
      %v1171 = vmax.f32 %v1155, 0.0
      %v1172 = vmax.f32 %v1156, 0.0
      %v1173 = vmax.f32 %v1157, 0.0
      %v1174 = vmax.f32 %v1158, 0.0
      %v1175 = vmax.f32 %v1159, 0.0
      %v1176 = vmax.f32 %v1160, 0.0
      %v1177 = vmax.f32 %v1161, 0.0
      %v1178 = vmax.f32 %v1162, 0.0
      %v1179 = vmax.f32 %v1163, 0.0
      %v1180 = vmax.f32 %v1164, 0.0
      %v1181 = vmax.f32 %v1165, 0.0
      %v1182 = vld [vmem:[%s3 + $0x20] sm:$0xff]
      %v1183 = vld [vmem:[%s3 + $0x28] sm:$0xff]
      %v1184 = vld [vmem:[%s3 + $0x30] sm:$0xff]
      %v1185 = vld [vmem:[%s3 + $0x38] sm:$0xff]
      %v1186 = vld [vmem:[%s3 + $0x40] sm:$0xff]
      %v1187 = vld [vmem:[%s3 + $0x48] sm:$0xff]
      %v1188 = vld [vmem:[%s3 + $0x50] sm:$0xff]
      %v1189 = vld [vmem:[%s3 + $0x58] sm:$0xff]
      %v1190 = vld [vmem:[%s3 + $0xa0] sm:$0x1]
      %v1191 = vlaneseq
      %v1192 = vshrl.u32 %v1191, 7
      %v1193 = vsub.s32 0, %v1192
      %v1194 = vrot.slane %v1190, %v1193
      %v1196 = vsel %vm432, %v1166, 0
      %v1199 = vsel %vm432, %v1167, 0
      %v1202 = vsel %vm432, %v1168, 0
      %v1205 = vsel %vm432, %v1169, 0
      %v1208 = vsel %vm432, %v1170, 0
      %v1211 = vsel %vm432, %v1171, 0
      %v1214 = vsel %vm432, %v1172, 0
      %v1217 = vsel %vm432, %v1173, 0
      %v1220 = vsel %vm432, %v1174, 0
      %v1223 = vsel %vm432, %v1175, 0
      %v1226 = vsel %vm432, %v1176, 0
      %v1229 = vsel %vm432, %v1177, 0
      %v1232 = vsel %vm432, %v1178, 0
      %v1235 = vsel %vm432, %v1179, 0
      %v1238 = vsel %vm432, %v1180, 0
      %v1241 = vsel %vm432, %v1181, 0
      %1243 = vmatprep.subr.mxu0 0.0
      %1244 = vmatpush1.msra.mxu0 0.0
      %1245 = vmatprep.subr.mxu0 0.0
      %1246 = vmatpush1.msra.mxu0 0.0
      %1247 = vmatprep.subr.mxu0 0.0
      %1248 = vmatpush1.msra.mxu0 0.0
      %1249 = vmatprep.subr.mxu0 0.0
      %1250 = vmatpush1.msra.mxu0 0.0
      %1251 = vmatprep.subr.mxu0 0.0
      %1252 = vmatpush1.msra.mxu0 0.0
      %1253 = vmatprep.subr.mxu0 0.0
      %1254 = vmatpush1.msra.mxu0 0.0
      %1255 = vmatprep.subr.mxu0 0.0
      %1256 = vmatpush1.msra.mxu0 0.0
      %1257 = vmatprep.subr.mxu0 0.0
      %1258 = vmatpush1.msra.mxu0 0.0
      %1259 = vmatprep.subr.mxu0 0.0
      %1260 = vmatpush1.msra.mxu0 %v1189
      %1261 = vmatprep.subr.mxu0 0.0
      %1262 = vmatpush1.msra.mxu0 %v1188
      %1263 = vmatprep.subr.mxu0 0.0
      %1264 = vmatpush1.msra.mxu0 %v1187
      %1265 = vmatprep.subr.mxu0 0.0
      %1266 = vmatpush1.msra.mxu0 %v1186
      %1267 = vmatprep.subr.mxu0 0.0
      %1268 = vmatpush1.msra.mxu0 %v1185
      %1269 = vmatprep.subr.mxu0 0.0
      %1270 = vmatpush1.msra.mxu0 %v1184
      %1271 = vmatprep.subr.mxu0 0.0
      %1272 = vmatpush1.msra.mxu0 %v1183
      %1273 = vmatprep.subr.mxu0 0.0
      %1274 = vmatpush1.msra.mxu0 %v1182
      %1275 = vmatprep.subr.mxu0 0.0
      %1276 = vmatpush2.msra.mxu0 0.0
      %1277 = vmatprep.subr.mxu0 0.0
      %1278 = vmatpush2.msra.mxu0 0.0
      %1279 = vmatprep.subr.mxu0 0.0
      %1280 = vmatpush2.msra.mxu0 0.0
      %1281 = vmatprep.subr.mxu0 0.0
      %1282 = vmatpush2.msra.mxu0 0.0
      %1283 = vmatprep.subr.mxu0 0.0
      %1284 = vmatpush2.msra.mxu0 0.0
      %1285 = vmatprep.subr.mxu0 0.0
      %1286 = vmatpush2.msra.mxu0 0.0
      %1287 = vmatprep.subr.mxu0 0.0
      %1288 = vmatpush2.msra.mxu0 0.0
      %1289 = vmatprep.subr.mxu0 0.0
      %1290 = vmatpush2.msra.mxu0 0.0
      %1291 = vmatprep.subr.mxu0 0.0
      %1292 = vmatpush2.msra.mxu0 0.0
      %1293 = vmatprep.subr.mxu0 0.0
      %1294 = vmatpush2.msra.mxu0 0.0
      %1295 = vmatprep.subr.mxu0 0.0
      %1296 = vmatpush2.msra.mxu0 0.0
      %1297 = vmatprep.subr.mxu0 0.0
      %1298 = vmatpush2.msra.mxu0 0.0
      %1299 = vmatprep.subr.mxu0 0.0
      %1300 = vmatpush2.msra.mxu0 0.0
      %1301 = vmatprep.subr.mxu0 0.0
      %1302 = vmatpush2.msra.mxu0 0.0
      %1303 = vmatprep.subr.mxu0 0.0
      %1304 = vmatpush2.msra.mxu0 0.0
      %1305 = vmatprep.subr.mxu0 0.0
      %1306 = vmatpush2.msra.mxu0 0.0
      %1307 = vmatprep.mubr.f32.mxu0 0.0
      %1308 = vmatmul.mubr.f32.gmra.mxu0 %v1196
      %v1309 = vpop.f32.mrf.mxu0
      %v1310 = vadd.f32 %v1194, %v1309
      %v1311 = vpop.f32.mrf.mxu0
      %1312 = vmatprep.mubr.f32.mxu0 0.0
      %1313 = vmatmul.mubr.f32.gmra.mxu0 %v1199
      %v1314 = vpop.f32.mrf.mxu0
      %v1315 = vadd.f32 %v1194, %v1314
      %v1316 = vpop.f32.mrf.mxu0
      %1317 = vmatprep.mubr.f32.mxu0 0.0
      %1318 = vmatmul.mubr.f32.gmra.mxu0 %v1202
      %v1319 = vpop.f32.mrf.mxu0
      %v1320 = vadd.f32 %v1194, %v1319
      %v1321 = vpop.f32.mrf.mxu0
      %1322 = vmatprep.mubr.f32.mxu0 0.0
      %1323 = vmatmul.mubr.f32.gmra.mxu0 %v1205
      %v1324 = vpop.f32.mrf.mxu0
      %v1325 = vadd.f32 %v1194, %v1324
      %v1326 = vpop.f32.mrf.mxu0
      %1327 = vmatprep.mubr.f32.mxu0 0.0
      %1328 = vmatmul.mubr.f32.gmra.mxu0 %v1208
      %v1329 = vpop.f32.mrf.mxu0
      %v1330 = vadd.f32 %v1194, %v1329
      %v1331 = vpop.f32.mrf.mxu0
      %1332 = vmatprep.mubr.f32.mxu0 0.0
      %1333 = vmatmul.mubr.f32.gmra.mxu0 %v1211
      %v1334 = vpop.f32.mrf.mxu0
      %v1335 = vadd.f32 %v1194, %v1334
      %v1336 = vpop.f32.mrf.mxu0
      %1337 = vmatprep.mubr.f32.mxu0 0.0
      %1338 = vmatmul.mubr.f32.gmra.mxu0 %v1214
      %v1339 = vpop.f32.mrf.mxu0
      %v1340 = vadd.f32 %v1194, %v1339
      %v1341 = vpop.f32.mrf.mxu0
      %1342 = vmatprep.mubr.f32.mxu0 0.0
      %1343 = vmatmul.mubr.f32.gmra.mxu0 %v1217
      %v1344 = vpop.f32.mrf.mxu0
      %v1345 = vadd.f32 %v1194, %v1344
      %v1346 = vpop.f32.mrf.mxu0
      %1347 = vmatprep.mubr.f32.mxu0 0.0
      %1348 = vmatmul.mubr.f32.gmra.mxu0 %v1220
      %v1349 = vpop.f32.mrf.mxu0
      %v1350 = vadd.f32 %v1194, %v1349
      %v1351 = vpop.f32.mrf.mxu0
      %1352 = vmatprep.mubr.f32.mxu0 0.0
      %1353 = vmatmul.mubr.f32.gmra.mxu0 %v1223
      %v1354 = vpop.f32.mrf.mxu0
      %v1355 = vadd.f32 %v1194, %v1354
      %v1356 = vpop.f32.mrf.mxu0
      %1357 = vmatprep.mubr.f32.mxu0 0.0
      %1358 = vmatmul.mubr.f32.gmra.mxu0 %v1226
      %v1359 = vpop.f32.mrf.mxu0
      %v1360 = vadd.f32 %v1194, %v1359
      %v1361 = vpop.f32.mrf.mxu0
      %1362 = vmatprep.mubr.f32.mxu0 0.0
      %1363 = vmatmul.mubr.f32.gmra.mxu0 %v1229
      %v1364 = vpop.f32.mrf.mxu0
      %v1365 = vadd.f32 %v1194, %v1364
      %v1366 = vpop.f32.mrf.mxu0
      %1367 = vmatprep.mubr.f32.mxu0 0.0
      %1368 = vmatmul.mubr.f32.gmra.mxu0 %v1232
      %v1369 = vpop.f32.mrf.mxu0
      %v1370 = vadd.f32 %v1194, %v1369
      %v1371 = vpop.f32.mrf.mxu0
      %1372 = vmatprep.mubr.f32.mxu0 0.0
      %1373 = vmatmul.mubr.f32.gmra.mxu0 %v1235
      %v1374 = vpop.f32.mrf.mxu0
      %v1375 = vadd.f32 %v1194, %v1374
      %v1376 = vpop.f32.mrf.mxu0
      %1377 = vmatprep.mubr.f32.mxu0 0.0
      %1378 = vmatmul.mubr.f32.gmra.mxu0 %v1238
      %v1379 = vpop.f32.mrf.mxu0
      %v1380 = vadd.f32 %v1194, %v1379
      %v1381 = vpop.f32.mrf.mxu0
      %1382 = vmatprep.mubr.f32.mxu0 0.0
      %1383 = vmatmul.mubr.f32.gmra.mxu0 %v1241
      %v1384 = vpop.f32.mrf.mxu0
      %v1385 = vadd.f32 %v1194, %v1384
      %v1386 = vpop.f32.mrf.mxu0
      %1387 = vdwg.mxu0
      %s1388 = sadd.s32 %s409, 1
      %s1389 = sld [smem:[#allocation3 + %s1388]]
      %s1390 = sld [smem:[#allocation4 + %s1388]]
      %v1391 = vstv %s1389
      %vm1392 = vcmp.lt.s32.totalorder %v193, %v1391
      %v1393 = vsel %vm1392, 1, 0
      %vm1394 = vcmp.eq.s32.totalorder %v1393, 1
      %v1395 = vsel %vm1394, %v1310, 0.0
      %v1396 = vsel %vm1394, %v1315, 0.0
      %v1397 = vsel %vm1394, %v1320, 0.0
      %v1398 = vsel %vm1394, %v1325, 0.0
      %v1399 = vsel %vm1394, %v1330, 0.0
      %v1400 = vsel %vm1394, %v1335, 0.0
      %v1401 = vsel %vm1394, %v1340, 0.0
      %v1402 = vsel %vm1394, %v1345, 0.0
      %v1403 = vsel %vm1394, %v1350, 0.0
      %v1404 = vsel %vm1394, %v1355, 0.0
      %v1405 = vsel %vm1394, %v1360, 0.0
      %v1406 = vsel %vm1394, %v1365, 0.0
      %v1407 = vsel %vm1394, %v1370, 0.0
      %v1408 = vsel %vm1394, %v1375, 0.0
      %v1409 = vsel %vm1394, %v1380, 0.0
      %v1410 = vsel %vm1394, %v1385, 0.0
      %v1412 = vsel %vm432, %v1395, 0
      %v1415 = vsel %vm432, %v1396, 0
      %v1418 = vsel %vm432, %v1397, 0
      %v1421 = vsel %vm432, %v1398, 0
      %v1424 = vsel %vm432, %v1399, 0
      %v1427 = vsel %vm432, %v1400, 0
      %v1430 = vsel %vm432, %v1401, 0
      %v1433 = vsel %vm432, %v1402, 0
      %v1436 = vsel %vm432, %v1403, 0
      %v1439 = vsel %vm432, %v1404, 0
      %v1442 = vsel %vm432, %v1405, 0
      %v1445 = vsel %vm432, %v1406, 0
      %v1448 = vsel %vm432, %v1407, 0
      %v1451 = vsel %vm432, %v1408, 0
      %v1454 = vsel %vm432, %v1409, 0
      %v1457 = vsel %vm432, %v1410, 0
      %1459 = vmatprep.subr.mxu0 0.0
      %1460 = vmatpush1.msra.mxu0 0.0
      %1461 = vmatprep.subr.mxu0 0.0
      %1462 = vmatpush1.msra.mxu0 0.0
      %1463 = vmatprep.subr.mxu0 0.0
      %1464 = vmatpush1.msra.mxu0 0.0
      %1465 = vmatprep.subr.mxu0 0.0
      %1466 = vmatpush1.msra.mxu0 0.0
      %1467 = vmatprep.subr.mxu0 0.0
      %1468 = vmatpush1.msra.mxu0 0.0
      %1469 = vmatprep.subr.mxu0 0.0
      %1470 = vmatpush1.msra.mxu0 0.0
      %1471 = vmatprep.subr.mxu0 0.0
      %1472 = vmatpush1.msra.mxu0 0.0
      %1473 = vmatprep.subr.mxu0 0.0
      %1474 = vmatpush1.msra.mxu0 0.0
      %1475 = vmatprep.subr.mxu0 0.0
      %1476 = vmatpush1.msra.mxu0 1.0
      %1477 = vmatprep.subr.mxu0 0.0
      %1478 = vmatpush1.msra.mxu0 1.0
      %1479 = vmatprep.subr.mxu0 0.0
      %1480 = vmatpush1.msra.mxu0 1.0
      %1481 = vmatprep.subr.mxu0 0.0
      %1482 = vmatpush1.msra.mxu0 1.0
      %1483 = vmatprep.subr.mxu0 0.0
      %1484 = vmatpush1.msra.mxu0 1.0
      %1485 = vmatprep.subr.mxu0 0.0
      %1486 = vmatpush1.msra.mxu0 1.0
      %1487 = vmatprep.subr.mxu0 0.0
      %1488 = vmatpush1.msra.mxu0 1.0
      %1489 = vmatprep.subr.mxu0 0.0
      %1490 = vmatpush1.msra.mxu0 1.0
      %1491 = vmatprep.subr.mxu0 0.0
      %1492 = vmatpush2.msra.mxu0 0.0
      %1493 = vmatprep.subr.mxu0 0.0
      %1494 = vmatpush2.msra.mxu0 0.0
      %1495 = vmatprep.subr.mxu0 0.0
      %1496 = vmatpush2.msra.mxu0 0.0
      %1497 = vmatprep.subr.mxu0 0.0
      %1498 = vmatpush2.msra.mxu0 0.0
      %1499 = vmatprep.subr.mxu0 0.0
      %1500 = vmatpush2.msra.mxu0 0.0
      %1501 = vmatprep.subr.mxu0 0.0
      %1502 = vmatpush2.msra.mxu0 0.0
      %1503 = vmatprep.subr.mxu0 0.0
      %1504 = vmatpush2.msra.mxu0 0.0
      %1505 = vmatprep.subr.mxu0 0.0
      %1506 = vmatpush2.msra.mxu0 0.0
      %1507 = vmatprep.subr.mxu0 0.0
      %1508 = vmatpush2.msra.mxu0 0.0
      %1509 = vmatprep.subr.mxu0 0.0
      %1510 = vmatpush2.msra.mxu0 0.0
      %1511 = vmatprep.subr.mxu0 0.0
      %1512 = vmatpush2.msra.mxu0 0.0
      %1513 = vmatprep.subr.mxu0 0.0
      %1514 = vmatpush2.msra.mxu0 0.0
      %1515 = vmatprep.subr.mxu0 0.0
      %1516 = vmatpush2.msra.mxu0 0.0
      %1517 = vmatprep.subr.mxu0 0.0
      %1518 = vmatpush2.msra.mxu0 0.0
      %1519 = vmatprep.subr.mxu0 0.0
      %1520 = vmatpush2.msra.mxu0 0.0
      %1521 = vmatprep.subr.mxu0 0.0
      %1522 = vmatpush2.msra.mxu0 0.0
      %1523 = vmatprep.mubr.f32.mxu0 0.0
      %1524 = vmatmul.mubr.f32.gmra.mxu0 %v1412
      %v1525 = vpop.f32.mrf.mxu0
      %v1526 = vadd.f32 0.0, %v1525
      %v1527 = vpop.f32.mrf.mxu0
      %1528 = vmatprep.mubr.f32.mxu0 0.0
      %1529 = vmatmul.mubr.f32.gmra.mxu0 %v1415
      %v1530 = vpop.f32.mrf.mxu0
      %v1531 = vadd.f32 0.0, %v1530
      %v1532 = vpop.f32.mrf.mxu0
      %1533 = vmatprep.mubr.f32.mxu0 0.0
      %1534 = vmatmul.mubr.f32.gmra.mxu0 %v1418
      %v1535 = vpop.f32.mrf.mxu0
      %v1536 = vadd.f32 0.0, %v1535
      %v1537 = vpop.f32.mrf.mxu0
      %1538 = vmatprep.mubr.f32.mxu0 0.0
      %1539 = vmatmul.mubr.f32.gmra.mxu0 %v1421
      %v1540 = vpop.f32.mrf.mxu0
      %v1541 = vadd.f32 0.0, %v1540
      %v1542 = vpop.f32.mrf.mxu0
      %1543 = vmatprep.mubr.f32.mxu0 0.0
      %1544 = vmatmul.mubr.f32.gmra.mxu0 %v1424
      %v1545 = vpop.f32.mrf.mxu0
      %v1546 = vadd.f32 0.0, %v1545
      %v1547 = vpop.f32.mrf.mxu0
      %1548 = vmatprep.mubr.f32.mxu0 0.0
      %1549 = vmatmul.mubr.f32.gmra.mxu0 %v1427
      %v1550 = vpop.f32.mrf.mxu0
      %v1551 = vadd.f32 0.0, %v1550
      %v1552 = vpop.f32.mrf.mxu0
      %1553 = vmatprep.mubr.f32.mxu0 0.0
      %1554 = vmatmul.mubr.f32.gmra.mxu0 %v1430
      %v1555 = vpop.f32.mrf.mxu0
      %v1556 = vadd.f32 0.0, %v1555
      %v1557 = vpop.f32.mrf.mxu0
      %1558 = vmatprep.mubr.f32.mxu0 0.0
      %1559 = vmatmul.mubr.f32.gmra.mxu0 %v1433
      %v1560 = vpop.f32.mrf.mxu0
      %v1561 = vadd.f32 0.0, %v1560
      %v1562 = vpop.f32.mrf.mxu0
      %1563 = vmatprep.mubr.f32.mxu0 0.0
      %1564 = vmatmul.mubr.f32.gmra.mxu0 %v1436
      %v1565 = vpop.f32.mrf.mxu0
      %v1566 = vadd.f32 0.0, %v1565
      %v1567 = vpop.f32.mrf.mxu0
      %1568 = vmatprep.mubr.f32.mxu0 0.0
      %1569 = vmatmul.mubr.f32.gmra.mxu0 %v1439
      %v1570 = vpop.f32.mrf.mxu0
      %v1571 = vadd.f32 0.0, %v1570
      %v1572 = vpop.f32.mrf.mxu0
      %1573 = vmatprep.mubr.f32.mxu0 0.0
      %1574 = vmatmul.mubr.f32.gmra.mxu0 %v1442
      %v1575 = vpop.f32.mrf.mxu0
      %v1576 = vadd.f32 0.0, %v1575
      %v1577 = vpop.f32.mrf.mxu0
      %1578 = vmatprep.mubr.f32.mxu0 0.0
      %1579 = vmatmul.mubr.f32.gmra.mxu0 %v1445
      %v1580 = vpop.f32.mrf.mxu0
      %v1581 = vadd.f32 0.0, %v1580
      %v1582 = vpop.f32.mrf.mxu0
      %1583 = vmatprep.mubr.f32.mxu0 0.0
      %1584 = vmatmul.mubr.f32.gmra.mxu0 %v1448
      %v1585 = vpop.f32.mrf.mxu0
      %v1586 = vadd.f32 0.0, %v1585
      %v1587 = vpop.f32.mrf.mxu0
      %1588 = vmatprep.mubr.f32.mxu0 0.0
      %1589 = vmatmul.mubr.f32.gmra.mxu0 %v1451
      %v1590 = vpop.f32.mrf.mxu0
      %v1591 = vadd.f32 0.0, %v1590
      %v1592 = vpop.f32.mrf.mxu0
      %1593 = vmatprep.mubr.f32.mxu0 0.0
      %1594 = vmatmul.mubr.f32.gmra.mxu0 %v1454
      %v1595 = vpop.f32.mrf.mxu0
      %v1596 = vadd.f32 0.0, %v1595
      %v1597 = vpop.f32.mrf.mxu0
      %1598 = vmatprep.mubr.f32.mxu0 0.0
      %1599 = vmatmul.mubr.f32.gmra.mxu0 %v1457
      %v1600 = vpop.f32.mrf.mxu0
      %v1601 = vadd.f32 0.0, %v1600
      %v1602 = vpop.f32.mrf.mxu0
      %1603 = vdwg.mxu0
      %v1604 = vstv %s1390
      %v1605 = vmul.f32 %v1526, %v1604
      %v1606 = vmul.f32 %v1531, %v1604
      %v1607 = vmul.f32 %v1536, %v1604
      %v1608 = vmul.f32 %v1541, %v1604
      %v1609 = vmul.f32 %v1546, %v1604
      %v1610 = vmul.f32 %v1551, %v1604
      %v1611 = vmul.f32 %v1556, %v1604
      %v1612 = vmul.f32 %v1561, %v1604
      %v1613 = vmul.f32 %v1566, %v1604
      %v1614 = vmul.f32 %v1571, %v1604
      %v1615 = vmul.f32 %v1576, %v1604
      %v1616 = vmul.f32 %v1581, %v1604
      %v1617 = vmul.f32 %v1586, %v1604
      %v1618 = vmul.f32 %v1591, %v1604
      %v1619 = vmul.f32 %v1596, %v1604
      %v1620 = vmul.f32 %v1601, %v1604
      %1622 = vset.pattern.permute.xlu0 0
      %1623 = vperm.xlu0 %1622, %v1605
      %v1624 = vpop.permute.xlu0 %1623
      %1627 = vset.pattern.permute.xlu0 0
      %1628 = vperm.xlu0 %1627, %v1606
      %v1629 = vpop.permute.xlu0 %1628
      %1632 = vset.pattern.permute.xlu0 0
      %1633 = vperm.xlu0 %1632, %v1607
      %v1634 = vpop.permute.xlu0 %1633
      %1637 = vset.pattern.permute.xlu0 0
      %1638 = vperm.xlu0 %1637, %v1608
      %v1639 = vpop.permute.xlu0 %1638
      %1642 = vset.pattern.permute.xlu0 0
      %1643 = vperm.xlu0 %1642, %v1609
      %v1644 = vpop.permute.xlu0 %1643
      %1647 = vset.pattern.permute.xlu0 0
      %1648 = vperm.xlu0 %1647, %v1610
      %v1649 = vpop.permute.xlu0 %1648
      %1652 = vset.pattern.permute.xlu0 0
      %1653 = vperm.xlu0 %1652, %v1611
      %v1654 = vpop.permute.xlu0 %1653
      %1657 = vset.pattern.permute.xlu0 0
      %1658 = vperm.xlu0 %1657, %v1612
      %v1659 = vpop.permute.xlu0 %1658
      %1662 = vset.pattern.permute.xlu0 0
      %1663 = vperm.xlu0 %1662, %v1613
      %v1664 = vpop.permute.xlu0 %1663
      %1667 = vset.pattern.permute.xlu0 0
      %1668 = vperm.xlu0 %1667, %v1614
      %v1669 = vpop.permute.xlu0 %1668
      %1672 = vset.pattern.permute.xlu0 0
      %1673 = vperm.xlu0 %1672, %v1615
      %v1674 = vpop.permute.xlu0 %1673
      %1677 = vset.pattern.permute.xlu0 0
      %1678 = vperm.xlu0 %1677, %v1616
      %v1679 = vpop.permute.xlu0 %1678
      %1682 = vset.pattern.permute.xlu0 0
      %1683 = vperm.xlu0 %1682, %v1617
      %v1684 = vpop.permute.xlu0 %1683
      %1687 = vset.pattern.permute.xlu0 0
      %1688 = vperm.xlu0 %1687, %v1618
      %v1689 = vpop.permute.xlu0 %1688
      %1692 = vset.pattern.permute.xlu0 0
      %1693 = vperm.xlu0 %1692, %v1619
      %v1694 = vpop.permute.xlu0 %1693
      %1697 = vset.pattern.permute.xlu0 0
      %1698 = vperm.xlu0 %1697, %v1620
      %v1699 = vpop.permute.xlu0 %1698
      %v1701 = vsub.f32 %v1395, %v1624
      %v1702 = vsub.f32 %v1396, %v1629
      %v1703 = vsub.f32 %v1397, %v1634
      %v1704 = vsub.f32 %v1398, %v1639
      %v1705 = vsub.f32 %v1399, %v1644
      %v1706 = vsub.f32 %v1400, %v1649
      %v1707 = vsub.f32 %v1401, %v1654
      %v1708 = vsub.f32 %v1402, %v1659
      %v1709 = vsub.f32 %v1403, %v1664
      %v1710 = vsub.f32 %v1404, %v1669
      %v1711 = vsub.f32 %v1405, %v1674
      %v1712 = vsub.f32 %v1406, %v1679
      %v1713 = vsub.f32 %v1407, %v1684
      %v1714 = vsub.f32 %v1408, %v1689
      %v1715 = vsub.f32 %v1409, %v1694
      %v1716 = vsub.f32 %v1410, %v1699
      %v1717 = vsel %vm1394, %v1701, 0.0
      %v1718 = vsel %vm1394, %v1702, 0.0
      %v1719 = vsel %vm1394, %v1703, 0.0
      %v1720 = vsel %vm1394, %v1704, 0.0
      %v1721 = vsel %vm1394, %v1705, 0.0
      %v1722 = vsel %vm1394, %v1706, 0.0
      %v1723 = vsel %vm1394, %v1707, 0.0
      %v1724 = vsel %vm1394, %v1708, 0.0
      %v1725 = vsel %vm1394, %v1709, 0.0
      %v1726 = vsel %vm1394, %v1710, 0.0
      %v1727 = vsel %vm1394, %v1711, 0.0
      %v1728 = vsel %vm1394, %v1712, 0.0
      %v1729 = vsel %vm1394, %v1713, 0.0
      %v1730 = vsel %vm1394, %v1714, 0.0
      %v1731 = vsel %vm1394, %v1715, 0.0
      %v1732 = vsel %vm1394, %v1716, 0.0
      %v1733 = vmul.f32 %v1717, %v1717
      %v1734 = vmul.f32 %v1718, %v1718
      %v1735 = vmul.f32 %v1719, %v1719
      %v1736 = vmul.f32 %v1720, %v1720
      %v1737 = vmul.f32 %v1721, %v1721
      %v1738 = vmul.f32 %v1722, %v1722
      %v1739 = vmul.f32 %v1723, %v1723
      %v1740 = vmul.f32 %v1724, %v1724
      %v1741 = vmul.f32 %v1725, %v1725
      %v1742 = vmul.f32 %v1726, %v1726
      %v1743 = vmul.f32 %v1727, %v1727
      %v1744 = vmul.f32 %v1728, %v1728
      %v1745 = vmul.f32 %v1729, %v1729
      %v1746 = vmul.f32 %v1730, %v1730
      %v1747 = vmul.f32 %v1731, %v1731
      %v1748 = vmul.f32 %v1732, %v1732
      %v1750 = vsel %vm432, %v1733, 0
      %v1753 = vsel %vm432, %v1734, 0
      %v1756 = vsel %vm432, %v1735, 0
      %v1759 = vsel %vm432, %v1736, 0
      %v1762 = vsel %vm432, %v1737, 0
      %v1765 = vsel %vm432, %v1738, 0
      %v1768 = vsel %vm432, %v1739, 0
      %v1771 = vsel %vm432, %v1740, 0
      %v1774 = vsel %vm432, %v1741, 0
      %v1777 = vsel %vm432, %v1742, 0
      %v1780 = vsel %vm432, %v1743, 0
      %v1783 = vsel %vm432, %v1744, 0
      %v1786 = vsel %vm432, %v1745, 0
      %v1789 = vsel %vm432, %v1746, 0
      %v1792 = vsel %vm432, %v1747, 0
      %v1795 = vsel %vm432, %v1748, 0
      %1797 = vmatprep.subr.mxu0 0.0
      %1798 = vmatpush1.msra.mxu0 0.0
      %1799 = vmatprep.subr.mxu0 0.0
      %1800 = vmatpush1.msra.mxu0 0.0
      %1801 = vmatprep.subr.mxu0 0.0
      %1802 = vmatpush1.msra.mxu0 0.0
      %1803 = vmatprep.subr.mxu0 0.0
      %1804 = vmatpush1.msra.mxu0 0.0
      %1805 = vmatprep.subr.mxu0 0.0
      %1806 = vmatpush1.msra.mxu0 0.0
      %1807 = vmatprep.subr.mxu0 0.0
      %1808 = vmatpush1.msra.mxu0 0.0
      %1809 = vmatprep.subr.mxu0 0.0
      %1810 = vmatpush1.msra.mxu0 0.0
      %1811 = vmatprep.subr.mxu0 0.0
      %1812 = vmatpush1.msra.mxu0 0.0
      %1813 = vmatprep.subr.mxu0 0.0
      %1814 = vmatpush1.msra.mxu0 1.0
      %1815 = vmatprep.subr.mxu0 0.0
      %1816 = vmatpush1.msra.mxu0 1.0
      %1817 = vmatprep.subr.mxu0 0.0
      %1818 = vmatpush1.msra.mxu0 1.0
      %1819 = vmatprep.subr.mxu0 0.0
      %1820 = vmatpush1.msra.mxu0 1.0
      %1821 = vmatprep.subr.mxu0 0.0
      %1822 = vmatpush1.msra.mxu0 1.0
      %1823 = vmatprep.subr.mxu0 0.0
      %1824 = vmatpush1.msra.mxu0 1.0
      %1825 = vmatprep.subr.mxu0 0.0
      %1826 = vmatpush1.msra.mxu0 1.0
      %1827 = vmatprep.subr.mxu0 0.0
      %1828 = vmatpush1.msra.mxu0 1.0
      %1829 = vmatprep.subr.mxu0 0.0
      %1830 = vmatpush2.msra.mxu0 0.0
      %1831 = vmatprep.subr.mxu0 0.0
      %1832 = vmatpush2.msra.mxu0 0.0
      %1833 = vmatprep.subr.mxu0 0.0
      %1834 = vmatpush2.msra.mxu0 0.0
      %1835 = vmatprep.subr.mxu0 0.0
      %1836 = vmatpush2.msra.mxu0 0.0
      %1837 = vmatprep.subr.mxu0 0.0
      %1838 = vmatpush2.msra.mxu0 0.0
      %1839 = vmatprep.subr.mxu0 0.0
      %1840 = vmatpush2.msra.mxu0 0.0
      %1841 = vmatprep.subr.mxu0 0.0
      %1842 = vmatpush2.msra.mxu0 0.0
      %1843 = vmatprep.subr.mxu0 0.0
      %1844 = vmatpush2.msra.mxu0 0.0
      %1845 = vmatprep.subr.mxu0 0.0
      %1846 = vmatpush2.msra.mxu0 0.0
      %1847 = vmatprep.subr.mxu0 0.0
      %1848 = vmatpush2.msra.mxu0 0.0
      %1849 = vmatprep.subr.mxu0 0.0
      %1850 = vmatpush2.msra.mxu0 0.0
      %1851 = vmatprep.subr.mxu0 0.0
      %1852 = vmatpush2.msra.mxu0 0.0
      %1853 = vmatprep.subr.mxu0 0.0
      %1854 = vmatpush2.msra.mxu0 0.0
      %1855 = vmatprep.subr.mxu0 0.0
      %1856 = vmatpush2.msra.mxu0 0.0
      %1857 = vmatprep.subr.mxu0 0.0
      %1858 = vmatpush2.msra.mxu0 0.0
      %1859 = vmatprep.subr.mxu0 0.0
      %1860 = vmatpush2.msra.mxu0 0.0
      %1861 = vmatprep.mubr.f32.mxu0 0.0
      %1862 = vmatmul.mubr.f32.gmra.mxu0 %v1750
      %v1863 = vpop.f32.mrf.mxu0
      %v1864 = vadd.f32 0.0, %v1863
      %v1865 = vpop.f32.mrf.mxu0
      %1866 = vmatprep.mubr.f32.mxu0 0.0
      %1867 = vmatmul.mubr.f32.gmra.mxu0 %v1753
      %v1868 = vpop.f32.mrf.mxu0
      %v1869 = vadd.f32 0.0, %v1868
      %v1870 = vpop.f32.mrf.mxu0
      %1871 = vmatprep.mubr.f32.mxu0 0.0
      %1872 = vmatmul.mubr.f32.gmra.mxu0 %v1756
      %v1873 = vpop.f32.mrf.mxu0
      %v1874 = vadd.f32 0.0, %v1873
      %v1875 = vpop.f32.mrf.mxu0
      %1876 = vmatprep.mubr.f32.mxu0 0.0
      %1877 = vmatmul.mubr.f32.gmra.mxu0 %v1759
      %v1878 = vpop.f32.mrf.mxu0
      %v1879 = vadd.f32 0.0, %v1878
      %v1880 = vpop.f32.mrf.mxu0
      %1881 = vmatprep.mubr.f32.mxu0 0.0
      %1882 = vmatmul.mubr.f32.gmra.mxu0 %v1762
      %v1883 = vpop.f32.mrf.mxu0
      %v1884 = vadd.f32 0.0, %v1883
      %v1885 = vpop.f32.mrf.mxu0
      %1886 = vmatprep.mubr.f32.mxu0 0.0
      %1887 = vmatmul.mubr.f32.gmra.mxu0 %v1765
      %v1888 = vpop.f32.mrf.mxu0
      %v1889 = vadd.f32 0.0, %v1888
      %v1890 = vpop.f32.mrf.mxu0
      %1891 = vmatprep.mubr.f32.mxu0 0.0
      %1892 = vmatmul.mubr.f32.gmra.mxu0 %v1768
      %v1893 = vpop.f32.mrf.mxu0
      %v1894 = vadd.f32 0.0, %v1893
      %v1895 = vpop.f32.mrf.mxu0
      %1896 = vmatprep.mubr.f32.mxu0 0.0
      %1897 = vmatmul.mubr.f32.gmra.mxu0 %v1771
      %v1898 = vpop.f32.mrf.mxu0
      %v1899 = vadd.f32 0.0, %v1898
      %v1900 = vpop.f32.mrf.mxu0
      %1901 = vmatprep.mubr.f32.mxu0 0.0
      %1902 = vmatmul.mubr.f32.gmra.mxu0 %v1774
      %v1903 = vpop.f32.mrf.mxu0
      %v1904 = vadd.f32 0.0, %v1903
      %v1905 = vpop.f32.mrf.mxu0
      %1906 = vmatprep.mubr.f32.mxu0 0.0
      %1907 = vmatmul.mubr.f32.gmra.mxu0 %v1777
      %v1908 = vpop.f32.mrf.mxu0
      %v1909 = vadd.f32 0.0, %v1908
      %v1910 = vpop.f32.mrf.mxu0
      %1911 = vmatprep.mubr.f32.mxu0 0.0
      %1912 = vmatmul.mubr.f32.gmra.mxu0 %v1780
      %v1913 = vpop.f32.mrf.mxu0
      %v1914 = vadd.f32 0.0, %v1913
      %v1915 = vpop.f32.mrf.mxu0
      %1916 = vmatprep.mubr.f32.mxu0 0.0
      %1917 = vmatmul.mubr.f32.gmra.mxu0 %v1783
      %v1918 = vpop.f32.mrf.mxu0
      %v1919 = vadd.f32 0.0, %v1918
      %v1920 = vpop.f32.mrf.mxu0
      %1921 = vmatprep.mubr.f32.mxu0 0.0
      %1922 = vmatmul.mubr.f32.gmra.mxu0 %v1786
      %v1923 = vpop.f32.mrf.mxu0
      %v1924 = vadd.f32 0.0, %v1923
      %v1925 = vpop.f32.mrf.mxu0
      %1926 = vmatprep.mubr.f32.mxu0 0.0
      %1927 = vmatmul.mubr.f32.gmra.mxu0 %v1789
      %v1928 = vpop.f32.mrf.mxu0
      %v1929 = vadd.f32 0.0, %v1928
      %v1930 = vpop.f32.mrf.mxu0
      %1931 = vmatprep.mubr.f32.mxu0 0.0
      %1932 = vmatmul.mubr.f32.gmra.mxu0 %v1792
      %v1933 = vpop.f32.mrf.mxu0
      %v1934 = vadd.f32 0.0, %v1933
      %v1935 = vpop.f32.mrf.mxu0
      %1936 = vmatprep.mubr.f32.mxu0 0.0
      %1937 = vmatmul.mubr.f32.gmra.mxu0 %v1795
      %v1938 = vpop.f32.mrf.mxu0
      %v1939 = vadd.f32 0.0, %v1938
      %v1940 = vpop.f32.mrf.mxu0
      %1941 = vdwg.mxu0
      %v1942 = vmul.f32 %v1864, %v1604
      %v1943 = vmul.f32 %v1869, %v1604
      %v1944 = vmul.f32 %v1874, %v1604
      %v1945 = vmul.f32 %v1879, %v1604
      %v1946 = vmul.f32 %v1884, %v1604
      %v1947 = vmul.f32 %v1889, %v1604
      %v1948 = vmul.f32 %v1894, %v1604
      %v1949 = vmul.f32 %v1899, %v1604
      %v1950 = vmul.f32 %v1904, %v1604
      %v1951 = vmul.f32 %v1909, %v1604
      %v1952 = vmul.f32 %v1914, %v1604
      %v1953 = vmul.f32 %v1919, %v1604
      %v1954 = vmul.f32 %v1924, %v1604
      %v1955 = vmul.f32 %v1929, %v1604
      %v1956 = vmul.f32 %v1934, %v1604
      %v1957 = vmul.f32 %v1939, %v1604
      %v1958 = vadd.f32 %v1942, 1e-05
      %v1959 = vadd.f32 %v1943, 1e-05
      %v1960 = vadd.f32 %v1944, 1e-05
      %v1961 = vadd.f32 %v1945, 1e-05
      %v1962 = vadd.f32 %v1946, 1e-05
      %v1963 = vadd.f32 %v1947, 1e-05
      %v1964 = vadd.f32 %v1948, 1e-05
      %v1965 = vadd.f32 %v1949, 1e-05
      %v1966 = vadd.f32 %v1950, 1e-05
      %v1967 = vadd.f32 %v1951, 1e-05
      %v1968 = vadd.f32 %v1952, 1e-05
      %v1969 = vadd.f32 %v1953, 1e-05
      %v1970 = vadd.f32 %v1954, 1e-05
      %v1971 = vadd.f32 %v1955, 1e-05
      %v1972 = vadd.f32 %v1956, 1e-05
      %v1973 = vadd.f32 %v1957, 1e-05
      %v1974 = vrsqrt.pop %v1958
      %v1975 = vrsqrt.pop %v1959
      %v1976 = vrsqrt.pop %v1960
      %v1977 = vrsqrt.pop %v1961
      %v1978 = vrsqrt.pop %v1962
      %v1979 = vrsqrt.pop %v1963
      %v1980 = vrsqrt.pop %v1964
      %v1981 = vrsqrt.pop %v1965
      %v1982 = vrsqrt.pop %v1966
      %v1983 = vrsqrt.pop %v1967
      %v1984 = vrsqrt.pop %v1968
      %v1985 = vrsqrt.pop %v1969
      %v1986 = vrsqrt.pop %v1970
      %v1987 = vrsqrt.pop %v1971
      %v1988 = vrsqrt.pop %v1972
      %v1989 = vrsqrt.pop %v1973
      %1991 = vset.pattern.permute.xlu0 0
      %1992 = vperm.xlu0 %1991, %v1974
      %v1993 = vpop.permute.xlu0 %1992
      %1996 = vset.pattern.permute.xlu0 0
      %1997 = vperm.xlu0 %1996, %v1975
      %v1998 = vpop.permute.xlu0 %1997
      %2001 = vset.pattern.permute.xlu0 0
      %2002 = vperm.xlu0 %2001, %v1976
      %v2003 = vpop.permute.xlu0 %2002
      %2006 = vset.pattern.permute.xlu0 0
      %2007 = vperm.xlu0 %2006, %v1977
      %v2008 = vpop.permute.xlu0 %2007
      %2011 = vset.pattern.permute.xlu0 0
      %2012 = vperm.xlu0 %2011, %v1978
      %v2013 = vpop.permute.xlu0 %2012
      %2016 = vset.pattern.permute.xlu0 0
      %2017 = vperm.xlu0 %2016, %v1979
      %v2018 = vpop.permute.xlu0 %2017
      %2021 = vset.pattern.permute.xlu0 0
      %2022 = vperm.xlu0 %2021, %v1980
      %v2023 = vpop.permute.xlu0 %2022
      %2026 = vset.pattern.permute.xlu0 0
      %2027 = vperm.xlu0 %2026, %v1981
      %v2028 = vpop.permute.xlu0 %2027
      %2031 = vset.pattern.permute.xlu0 0
      %2032 = vperm.xlu0 %2031, %v1982
      %v2033 = vpop.permute.xlu0 %2032
      %2036 = vset.pattern.permute.xlu0 0
      %2037 = vperm.xlu0 %2036, %v1983
      %v2038 = vpop.permute.xlu0 %2037
      %2041 = vset.pattern.permute.xlu0 0
      %2042 = vperm.xlu0 %2041, %v1984
      %v2043 = vpop.permute.xlu0 %2042
      %2046 = vset.pattern.permute.xlu0 0
      %2047 = vperm.xlu0 %2046, %v1985
      %v2048 = vpop.permute.xlu0 %2047
      %2051 = vset.pattern.permute.xlu0 0
      %2052 = vperm.xlu0 %2051, %v1986
      %v2053 = vpop.permute.xlu0 %2052
      %2056 = vset.pattern.permute.xlu0 0
      %2057 = vperm.xlu0 %2056, %v1987
      %v2058 = vpop.permute.xlu0 %2057
      %2061 = vset.pattern.permute.xlu0 0
      %2062 = vperm.xlu0 %2061, %v1988
      %v2063 = vpop.permute.xlu0 %2062
      %2066 = vset.pattern.permute.xlu0 0
      %2067 = vperm.xlu0 %2066, %v1989
      %v2068 = vpop.permute.xlu0 %2067
      %v2070 = vmul.f32 %v1717, %v1993
      %v2071 = vmul.f32 %v1718, %v1998
      %v2072 = vmul.f32 %v1719, %v2003
      %v2073 = vmul.f32 %v1720, %v2008
      %v2074 = vmul.f32 %v1721, %v2013
      %v2075 = vmul.f32 %v1722, %v2018
      %v2076 = vmul.f32 %v1723, %v2023
      %v2077 = vmul.f32 %v1724, %v2028
      %v2078 = vmul.f32 %v1725, %v2033
      %v2079 = vmul.f32 %v1726, %v2038
      %v2080 = vmul.f32 %v1727, %v2043
      %v2081 = vmul.f32 %v1728, %v2048
      %v2082 = vmul.f32 %v1729, %v2053
      %v2083 = vmul.f32 %v1730, %v2058
      %v2084 = vmul.f32 %v1731, %v2063
      %v2085 = vmul.f32 %v1732, %v2068
      %v2086 = vld [vmem:[%s3 + $0x11] sm:$0x1]
      %v2087 = vld [vmem:[%s3 + $0x19] sm:$0x1]
      %v2088 = vlaneseq
      %v2089 = vshrl.u32 %v2088, 7
      %v2090 = vsub.s32 0, %v2089
      %v2091 = vrot.slane %v2086, %v2090
      %v2092 = vmul.f32 %v2091, %v2070
      %v2093 = vmul.f32 %v2091, %v2071
      %v2094 = vmul.f32 %v2091, %v2072
      %v2095 = vmul.f32 %v2091, %v2073
      %v2096 = vmul.f32 %v2091, %v2074
      %v2097 = vmul.f32 %v2091, %v2075
      %v2098 = vmul.f32 %v2091, %v2076
      %v2099 = vmul.f32 %v2091, %v2077
      %v2100 = vmul.f32 %v2091, %v2078
      %v2101 = vmul.f32 %v2091, %v2079
      %v2102 = vmul.f32 %v2091, %v2080
      %v2103 = vmul.f32 %v2091, %v2081
      %v2104 = vmul.f32 %v2091, %v2082
      %v2105 = vmul.f32 %v2091, %v2083
      %v2106 = vmul.f32 %v2091, %v2084
      %v2107 = vmul.f32 %v2091, %v2085
      %v2108 = vlaneseq
      %v2109 = vshrl.u32 %v2108, 7
      %v2110 = vsub.s32 0, %v2109
      %v2111 = vrot.slane %v2087, %v2110
      %v2112 = vadd.f32 %v2092, %v2111
      %v2113 = vadd.f32 %v2093, %v2111
      %v2114 = vadd.f32 %v2094, %v2111
      %v2115 = vadd.f32 %v2095, %v2111
      %v2116 = vadd.f32 %v2096, %v2111
      %v2117 = vadd.f32 %v2097, %v2111
      %v2118 = vadd.f32 %v2098, %v2111
      %v2119 = vadd.f32 %v2099, %v2111
      %v2120 = vadd.f32 %v2100, %v2111
      %v2121 = vadd.f32 %v2101, %v2111
      %v2122 = vadd.f32 %v2102, %v2111
      %v2123 = vadd.f32 %v2103, %v2111
      %v2124 = vadd.f32 %v2104, %v2111
      %v2125 = vadd.f32 %v2105, %v2111
      %v2126 = vadd.f32 %v2106, %v2111
      %v2127 = vadd.f32 %v2107, %v2111
      %v2128 = vsel %vm1394, %v2112, 0.0
      %v2129 = vsel %vm1394, %v2113, 0.0
      %v2130 = vsel %vm1394, %v2114, 0.0
      %v2131 = vsel %vm1394, %v2115, 0.0
      %v2132 = vsel %vm1394, %v2116, 0.0
      %v2133 = vsel %vm1394, %v2117, 0.0
      %v2134 = vsel %vm1394, %v2118, 0.0
      %v2135 = vsel %vm1394, %v2119, 0.0
      %v2136 = vsel %vm1394, %v2120, 0.0
      %v2137 = vsel %vm1394, %v2121, 0.0
      %v2138 = vsel %vm1394, %v2122, 0.0
      %v2139 = vsel %vm1394, %v2123, 0.0
      %v2140 = vsel %vm1394, %v2124, 0.0
      %v2141 = vsel %vm1394, %v2125, 0.0
      %v2142 = vsel %vm1394, %v2126, 0.0
      %v2143 = vsel %vm1394, %v2127, 0.0
      %v2144 = vmax.f32 %v2128, 0.0
      %v2145 = vmax.f32 %v2129, 0.0
      %v2146 = vmax.f32 %v2130, 0.0
      %v2147 = vmax.f32 %v2131, 0.0
      %v2148 = vmax.f32 %v2132, 0.0
      %v2149 = vmax.f32 %v2133, 0.0
      %v2150 = vmax.f32 %v2134, 0.0
      %v2151 = vmax.f32 %v2135, 0.0
      %v2152 = vmax.f32 %v2136, 0.0
      %v2153 = vmax.f32 %v2137, 0.0
      %v2154 = vmax.f32 %v2138, 0.0
      %v2155 = vmax.f32 %v2139, 0.0
      %v2156 = vmax.f32 %v2140, 0.0
      %v2157 = vmax.f32 %v2141, 0.0
      %v2158 = vmax.f32 %v2142, 0.0
      %v2159 = vmax.f32 %v2143, 0.0
      %v2160 = vld [vmem:[%s3 + $0x60] sm:$0xff]
      %v2161 = vld [vmem:[%s3 + $0x68] sm:$0xff]
      %v2162 = vld [vmem:[%s3 + $0x70] sm:$0xff]
      %v2163 = vld [vmem:[%s3 + $0x78] sm:$0xff]
      %v2164 = vld [vmem:[%s3 + $0x80] sm:$0xff]
      %v2165 = vld [vmem:[%s3 + $0x88] sm:$0xff]
      %v2166 = vld [vmem:[%s3 + $0x90] sm:$0xff]
      %v2167 = vld [vmem:[%s3 + $0x98] sm:$0xff]
      %v2168 = vld [vmem:[%s3 + $0xa1] sm:$0x1]
      %v2169 = vlaneseq
      %v2170 = vshrl.u32 %v2169, 7
      %v2171 = vsub.s32 0, %v2170
      %v2172 = vrot.slane %v2168, %v2171
      %v2174 = vsel %vm432, %v2144, 0
      %v2177 = vsel %vm432, %v2145, 0
      %v2180 = vsel %vm432, %v2146, 0
      %v2183 = vsel %vm432, %v2147, 0
      %v2186 = vsel %vm432, %v2148, 0
      %v2189 = vsel %vm432, %v2149, 0
      %v2192 = vsel %vm432, %v2150, 0
      %v2195 = vsel %vm432, %v2151, 0
      %v2198 = vsel %vm432, %v2152, 0
      %v2201 = vsel %vm432, %v2153, 0
      %v2204 = vsel %vm432, %v2154, 0
      %v2207 = vsel %vm432, %v2155, 0
      %v2210 = vsel %vm432, %v2156, 0
      %v2213 = vsel %vm432, %v2157, 0
      %v2216 = vsel %vm432, %v2158, 0
      %v2219 = vsel %vm432, %v2159, 0
      %2221 = vmatprep.subr.mxu0 0.0
      %2222 = vmatpush1.msra.mxu0 0.0
      %2223 = vmatprep.subr.mxu0 0.0
      %2224 = vmatpush1.msra.mxu0 0.0
      %2225 = vmatprep.subr.mxu0 0.0
      %2226 = vmatpush1.msra.mxu0 0.0
      %2227 = vmatprep.subr.mxu0 0.0
      %2228 = vmatpush1.msra.mxu0 0.0
      %2229 = vmatprep.subr.mxu0 0.0
      %2230 = vmatpush1.msra.mxu0 0.0
      %2231 = vmatprep.subr.mxu0 0.0
      %2232 = vmatpush1.msra.mxu0 0.0
      %2233 = vmatprep.subr.mxu0 0.0
      %2234 = vmatpush1.msra.mxu0 0.0
      %2235 = vmatprep.subr.mxu0 0.0
      %2236 = vmatpush1.msra.mxu0 0.0
      %2237 = vmatprep.subr.mxu0 0.0
      %2238 = vmatpush1.msra.mxu0 %v2167
      %2239 = vmatprep.subr.mxu0 0.0
      %2240 = vmatpush1.msra.mxu0 %v2166
      %2241 = vmatprep.subr.mxu0 0.0
      %2242 = vmatpush1.msra.mxu0 %v2165
      %2243 = vmatprep.subr.mxu0 0.0
      %2244 = vmatpush1.msra.mxu0 %v2164
      %2245 = vmatprep.subr.mxu0 0.0
      %2246 = vmatpush1.msra.mxu0 %v2163
      %2247 = vmatprep.subr.mxu0 0.0
      %2248 = vmatpush1.msra.mxu0 %v2162
      %2249 = vmatprep.subr.mxu0 0.0
      %2250 = vmatpush1.msra.mxu0 %v2161
      %2251 = vmatprep.subr.mxu0 0.0
      %2252 = vmatpush1.msra.mxu0 %v2160
      %2253 = vmatprep.subr.mxu0 0.0
      %2254 = vmatpush2.msra.mxu0 0.0
      %2255 = vmatprep.subr.mxu0 0.0
      %2256 = vmatpush2.msra.mxu0 0.0
      %2257 = vmatprep.subr.mxu0 0.0
      %2258 = vmatpush2.msra.mxu0 0.0
      %2259 = vmatprep.subr.mxu0 0.0
      %2260 = vmatpush2.msra.mxu0 0.0
      %2261 = vmatprep.subr.mxu0 0.0
      %2262 = vmatpush2.msra.mxu0 0.0
      %2263 = vmatprep.subr.mxu0 0.0
      %2264 = vmatpush2.msra.mxu0 0.0
      %2265 = vmatprep.subr.mxu0 0.0
      %2266 = vmatpush2.msra.mxu0 0.0
      %2267 = vmatprep.subr.mxu0 0.0
      %2268 = vmatpush2.msra.mxu0 0.0
      %2269 = vmatprep.subr.mxu0 0.0
      %2270 = vmatpush2.msra.mxu0 0.0
      %2271 = vmatprep.subr.mxu0 0.0
      %2272 = vmatpush2.msra.mxu0 0.0
      %2273 = vmatprep.subr.mxu0 0.0
      %2274 = vmatpush2.msra.mxu0 0.0
      %2275 = vmatprep.subr.mxu0 0.0
      %2276 = vmatpush2.msra.mxu0 0.0
      %2277 = vmatprep.subr.mxu0 0.0
      %2278 = vmatpush2.msra.mxu0 0.0
      %2279 = vmatprep.subr.mxu0 0.0
      %2280 = vmatpush2.msra.mxu0 0.0
      %2281 = vmatprep.subr.mxu0 0.0
      %2282 = vmatpush2.msra.mxu0 0.0
      %2283 = vmatprep.subr.mxu0 0.0
      %2284 = vmatpush2.msra.mxu0 0.0
      %2285 = vmatprep.mubr.f32.mxu0 0.0
      %2286 = vmatmul.mubr.f32.gmra.mxu0 %v2174
      %v2287 = vpop.f32.mrf.mxu0
      %v2288 = vadd.f32 %v2172, %v2287
      %v2289 = vpop.f32.mrf.mxu0
      %2290 = vmatprep.mubr.f32.mxu0 0.0
      %2291 = vmatmul.mubr.f32.gmra.mxu0 %v2177
      %v2292 = vpop.f32.mrf.mxu0
      %v2293 = vadd.f32 %v2172, %v2292
      %v2294 = vpop.f32.mrf.mxu0
      %2295 = vmatprep.mubr.f32.mxu0 0.0
      %2296 = vmatmul.mubr.f32.gmra.mxu0 %v2180
      %v2297 = vpop.f32.mrf.mxu0
      %v2298 = vadd.f32 %v2172, %v2297
      %v2299 = vpop.f32.mrf.mxu0
      %2300 = vmatprep.mubr.f32.mxu0 0.0
      %2301 = vmatmul.mubr.f32.gmra.mxu0 %v2183
      %v2302 = vpop.f32.mrf.mxu0
      %v2303 = vadd.f32 %v2172, %v2302
      %v2304 = vpop.f32.mrf.mxu0
      %2305 = vmatprep.mubr.f32.mxu0 0.0
      %2306 = vmatmul.mubr.f32.gmra.mxu0 %v2186
      %v2307 = vpop.f32.mrf.mxu0
      %v2308 = vadd.f32 %v2172, %v2307
      %v2309 = vpop.f32.mrf.mxu0
      %2310 = vmatprep.mubr.f32.mxu0 0.0
      %2311 = vmatmul.mubr.f32.gmra.mxu0 %v2189
      %v2312 = vpop.f32.mrf.mxu0
      %v2313 = vadd.f32 %v2172, %v2312
      %v2314 = vpop.f32.mrf.mxu0
      %2315 = vmatprep.mubr.f32.mxu0 0.0
      %2316 = vmatmul.mubr.f32.gmra.mxu0 %v2192
      %v2317 = vpop.f32.mrf.mxu0
      %v2318 = vadd.f32 %v2172, %v2317
      %v2319 = vpop.f32.mrf.mxu0
      %2320 = vmatprep.mubr.f32.mxu0 0.0
      %2321 = vmatmul.mubr.f32.gmra.mxu0 %v2195
      %v2322 = vpop.f32.mrf.mxu0
      %v2323 = vadd.f32 %v2172, %v2322
      %v2324 = vpop.f32.mrf.mxu0
      %2325 = vmatprep.mubr.f32.mxu0 0.0
      %2326 = vmatmul.mubr.f32.gmra.mxu0 %v2198
      %v2327 = vpop.f32.mrf.mxu0
      %v2328 = vadd.f32 %v2172, %v2327
      %v2329 = vpop.f32.mrf.mxu0
      %2330 = vmatprep.mubr.f32.mxu0 0.0
      %2331 = vmatmul.mubr.f32.gmra.mxu0 %v2201
      %v2332 = vpop.f32.mrf.mxu0
      %v2333 = vadd.f32 %v2172, %v2332
      %v2334 = vpop.f32.mrf.mxu0
      %2335 = vmatprep.mubr.f32.mxu0 0.0
      %2336 = vmatmul.mubr.f32.gmra.mxu0 %v2204
      %v2337 = vpop.f32.mrf.mxu0
      %v2338 = vadd.f32 %v2172, %v2337
      %v2339 = vpop.f32.mrf.mxu0
      %2340 = vmatprep.mubr.f32.mxu0 0.0
      %2341 = vmatmul.mubr.f32.gmra.mxu0 %v2207
      %v2342 = vpop.f32.mrf.mxu0
      %v2343 = vadd.f32 %v2172, %v2342
      %v2344 = vpop.f32.mrf.mxu0
      %2345 = vmatprep.mubr.f32.mxu0 0.0
      %2346 = vmatmul.mubr.f32.gmra.mxu0 %v2210
      %v2347 = vpop.f32.mrf.mxu0
      %v2348 = vadd.f32 %v2172, %v2347
      %v2349 = vpop.f32.mrf.mxu0
      %2350 = vmatprep.mubr.f32.mxu0 0.0
      %2351 = vmatmul.mubr.f32.gmra.mxu0 %v2213
      %v2352 = vpop.f32.mrf.mxu0
      %v2353 = vadd.f32 %v2172, %v2352
      %v2354 = vpop.f32.mrf.mxu0
      %2355 = vmatprep.mubr.f32.mxu0 0.0
      %2356 = vmatmul.mubr.f32.gmra.mxu0 %v2216
      %v2357 = vpop.f32.mrf.mxu0
      %v2358 = vadd.f32 %v2172, %v2357
      %v2359 = vpop.f32.mrf.mxu0
      %2360 = vmatprep.mubr.f32.mxu0 0.0
      %2361 = vmatmul.mubr.f32.gmra.mxu0 %v2219
      %v2362 = vpop.f32.mrf.mxu0
      %v2363 = vadd.f32 %v2172, %v2362
      %v2364 = vpop.f32.mrf.mxu0
      %2365 = vdwg.mxu0
      %s2366 = sadd.s32 %s409, 2
      %s2367 = sld [smem:[#allocation3 + %s2366]]
      %s2368 = sld [smem:[#allocation4 + %s2366]]
      %v2369 = vstv %s2367
      %vm2370 = vcmp.lt.s32.totalorder %v193, %v2369
      %v2371 = vsel %vm2370, 1, 0
      %vm2372 = vcmp.eq.s32.totalorder %v2371, 1
      %v2373 = vsel %vm2372, %v2288, 0.0
      %v2374 = vsel %vm2372, %v2293, 0.0
      %v2375 = vsel %vm2372, %v2298, 0.0
      %v2376 = vsel %vm2372, %v2303, 0.0
      %v2377 = vsel %vm2372, %v2308, 0.0
      %v2378 = vsel %vm2372, %v2313, 0.0
      %v2379 = vsel %vm2372, %v2318, 0.0
      %v2380 = vsel %vm2372, %v2323, 0.0
      %v2381 = vsel %vm2372, %v2328, 0.0
      %v2382 = vsel %vm2372, %v2333, 0.0
      %v2383 = vsel %vm2372, %v2338, 0.0
      %v2384 = vsel %vm2372, %v2343, 0.0
      %v2385 = vsel %vm2372, %v2348, 0.0
      %v2386 = vsel %vm2372, %v2353, 0.0
      %v2387 = vsel %vm2372, %v2358, 0.0
      %v2388 = vsel %vm2372, %v2363, 0.0
      %v2390 = vsel %vm432, %v2373, 0
      %v2393 = vsel %vm432, %v2374, 0
      %v2396 = vsel %vm432, %v2375, 0
      %v2399 = vsel %vm432, %v2376, 0
      %v2402 = vsel %vm432, %v2377, 0
      %v2405 = vsel %vm432, %v2378, 0
      %v2408 = vsel %vm432, %v2379, 0
      %v2411 = vsel %vm432, %v2380, 0
      %v2414 = vsel %vm432, %v2381, 0
      %v2417 = vsel %vm432, %v2382, 0
      %v2420 = vsel %vm432, %v2383, 0
      %v2423 = vsel %vm432, %v2384, 0
      %v2426 = vsel %vm432, %v2385, 0
      %v2429 = vsel %vm432, %v2386, 0
      %v2432 = vsel %vm432, %v2387, 0
      %v2435 = vsel %vm432, %v2388, 0
      %2437 = vmatprep.subr.mxu0 0.0
      %2438 = vmatpush1.msra.mxu0 0.0
      %2439 = vmatprep.subr.mxu0 0.0
      %2440 = vmatpush1.msra.mxu0 0.0
      %2441 = vmatprep.subr.mxu0 0.0
      %2442 = vmatpush1.msra.mxu0 0.0
      %2443 = vmatprep.subr.mxu0 0.0
      %2444 = vmatpush1.msra.mxu0 0.0
      %2445 = vmatprep.subr.mxu0 0.0
      %2446 = vmatpush1.msra.mxu0 0.0
      %2447 = vmatprep.subr.mxu0 0.0
      %2448 = vmatpush1.msra.mxu0 0.0
      %2449 = vmatprep.subr.mxu0 0.0
      %2450 = vmatpush1.msra.mxu0 0.0
      %2451 = vmatprep.subr.mxu0 0.0
      %2452 = vmatpush1.msra.mxu0 0.0
      %2453 = vmatprep.subr.mxu0 0.0
      %2454 = vmatpush1.msra.mxu0 1.0
      %2455 = vmatprep.subr.mxu0 0.0
      %2456 = vmatpush1.msra.mxu0 1.0
      %2457 = vmatprep.subr.mxu0 0.0
      %2458 = vmatpush1.msra.mxu0 1.0
      %2459 = vmatprep.subr.mxu0 0.0
      %2460 = vmatpush1.msra.mxu0 1.0
      %2461 = vmatprep.subr.mxu0 0.0
      %2462 = vmatpush1.msra.mxu0 1.0
      %2463 = vmatprep.subr.mxu0 0.0
      %2464 = vmatpush1.msra.mxu0 1.0
      %2465 = vmatprep.subr.mxu0 0.0
      %2466 = vmatpush1.msra.mxu0 1.0
      %2467 = vmatprep.subr.mxu0 0.0
      %2468 = vmatpush1.msra.mxu0 1.0
      %2469 = vmatprep.subr.mxu0 0.0
      %2470 = vmatpush2.msra.mxu0 0.0
      %2471 = vmatprep.subr.mxu0 0.0
      %2472 = vmatpush2.msra.mxu0 0.0
      %2473 = vmatprep.subr.mxu0 0.0
      %2474 = vmatpush2.msra.mxu0 0.0
      %2475 = vmatprep.subr.mxu0 0.0
      %2476 = vmatpush2.msra.mxu0 0.0
      %2477 = vmatprep.subr.mxu0 0.0
      %2478 = vmatpush2.msra.mxu0 0.0
      %2479 = vmatprep.subr.mxu0 0.0
      %2480 = vmatpush2.msra.mxu0 0.0
      %2481 = vmatprep.subr.mxu0 0.0
      %2482 = vmatpush2.msra.mxu0 0.0
      %2483 = vmatprep.subr.mxu0 0.0
      %2484 = vmatpush2.msra.mxu0 0.0
      %2485 = vmatprep.subr.mxu0 0.0
      %2486 = vmatpush2.msra.mxu0 0.0
      %2487 = vmatprep.subr.mxu0 0.0
      %2488 = vmatpush2.msra.mxu0 0.0
      %2489 = vmatprep.subr.mxu0 0.0
      %2490 = vmatpush2.msra.mxu0 0.0
      %2491 = vmatprep.subr.mxu0 0.0
      %2492 = vmatpush2.msra.mxu0 0.0
      %2493 = vmatprep.subr.mxu0 0.0
      %2494 = vmatpush2.msra.mxu0 0.0
      %2495 = vmatprep.subr.mxu0 0.0
      %2496 = vmatpush2.msra.mxu0 0.0
      %2497 = vmatprep.subr.mxu0 0.0
      %2498 = vmatpush2.msra.mxu0 0.0
      %2499 = vmatprep.subr.mxu0 0.0
      %2500 = vmatpush2.msra.mxu0 0.0
      %2501 = vmatprep.mubr.f32.mxu0 0.0
      %2502 = vmatmul.mubr.f32.gmra.mxu0 %v2390
      %v2503 = vpop.f32.mrf.mxu0
      %v2504 = vadd.f32 0.0, %v2503
      %v2505 = vpop.f32.mrf.mxu0
      %2506 = vmatprep.mubr.f32.mxu0 0.0
      %2507 = vmatmul.mubr.f32.gmra.mxu0 %v2393
      %v2508 = vpop.f32.mrf.mxu0
      %v2509 = vadd.f32 0.0, %v2508
      %v2510 = vpop.f32.mrf.mxu0
      %2511 = vmatprep.mubr.f32.mxu0 0.0
      %2512 = vmatmul.mubr.f32.gmra.mxu0 %v2396
      %v2513 = vpop.f32.mrf.mxu0
      %v2514 = vadd.f32 0.0, %v2513
      %v2515 = vpop.f32.mrf.mxu0
      %2516 = vmatprep.mubr.f32.mxu0 0.0
      %2517 = vmatmul.mubr.f32.gmra.mxu0 %v2399
      %v2518 = vpop.f32.mrf.mxu0
      %v2519 = vadd.f32 0.0, %v2518
      %v2520 = vpop.f32.mrf.mxu0
      %2521 = vmatprep.mubr.f32.mxu0 0.0
      %2522 = vmatmul.mubr.f32.gmra.mxu0 %v2402
      %v2523 = vpop.f32.mrf.mxu0
      %v2524 = vadd.f32 0.0, %v2523
      %v2525 = vpop.f32.mrf.mxu0
      %2526 = vmatprep.mubr.f32.mxu0 0.0
      %2527 = vmatmul.mubr.f32.gmra.mxu0 %v2405
      %v2528 = vpop.f32.mrf.mxu0
      %v2529 = vadd.f32 0.0, %v2528
      %v2530 = vpop.f32.mrf.mxu0
      %2531 = vmatprep.mubr.f32.mxu0 0.0
      %2532 = vmatmul.mubr.f32.gmra.mxu0 %v2408
      %v2533 = vpop.f32.mrf.mxu0
      %v2534 = vadd.f32 0.0, %v2533
      %v2535 = vpop.f32.mrf.mxu0
      %2536 = vmatprep.mubr.f32.mxu0 0.0
      %2537 = vmatmul.mubr.f32.gmra.mxu0 %v2411
      %v2538 = vpop.f32.mrf.mxu0
      %v2539 = vadd.f32 0.0, %v2538
      %v2540 = vpop.f32.mrf.mxu0
      %2541 = vmatprep.mubr.f32.mxu0 0.0
      %2542 = vmatmul.mubr.f32.gmra.mxu0 %v2414
      %v2543 = vpop.f32.mrf.mxu0
      %v2544 = vadd.f32 0.0, %v2543
      %v2545 = vpop.f32.mrf.mxu0
      %2546 = vmatprep.mubr.f32.mxu0 0.0
      %2547 = vmatmul.mubr.f32.gmra.mxu0 %v2417
      %v2548 = vpop.f32.mrf.mxu0
      %v2549 = vadd.f32 0.0, %v2548
      %v2550 = vpop.f32.mrf.mxu0
      %2551 = vmatprep.mubr.f32.mxu0 0.0
      %2552 = vmatmul.mubr.f32.gmra.mxu0 %v2420
      %v2553 = vpop.f32.mrf.mxu0
      %v2554 = vadd.f32 0.0, %v2553
      %v2555 = vpop.f32.mrf.mxu0
      %2556 = vmatprep.mubr.f32.mxu0 0.0
      %2557 = vmatmul.mubr.f32.gmra.mxu0 %v2423
      %v2558 = vpop.f32.mrf.mxu0
      %v2559 = vadd.f32 0.0, %v2558
      %v2560 = vpop.f32.mrf.mxu0
      %2561 = vmatprep.mubr.f32.mxu0 0.0
      %2562 = vmatmul.mubr.f32.gmra.mxu0 %v2426
      %v2563 = vpop.f32.mrf.mxu0
      %v2564 = vadd.f32 0.0, %v2563
      %v2565 = vpop.f32.mrf.mxu0
      %2566 = vmatprep.mubr.f32.mxu0 0.0
      %2567 = vmatmul.mubr.f32.gmra.mxu0 %v2429
      %v2568 = vpop.f32.mrf.mxu0
      %v2569 = vadd.f32 0.0, %v2568
      %v2570 = vpop.f32.mrf.mxu0
      %2571 = vmatprep.mubr.f32.mxu0 0.0
      %2572 = vmatmul.mubr.f32.gmra.mxu0 %v2432
      %v2573 = vpop.f32.mrf.mxu0
      %v2574 = vadd.f32 0.0, %v2573
      %v2575 = vpop.f32.mrf.mxu0
      %2576 = vmatprep.mubr.f32.mxu0 0.0
      %2577 = vmatmul.mubr.f32.gmra.mxu0 %v2435
      %v2578 = vpop.f32.mrf.mxu0
      %v2579 = vadd.f32 0.0, %v2578
      %v2580 = vpop.f32.mrf.mxu0
      %2581 = vdwg.mxu0
      %v2582 = vstv %s2368
      %v2583 = vmul.f32 %v2504, %v2582
      %v2584 = vmul.f32 %v2509, %v2582
      %v2585 = vmul.f32 %v2514, %v2582
      %v2586 = vmul.f32 %v2519, %v2582
      %v2587 = vmul.f32 %v2524, %v2582
      %v2588 = vmul.f32 %v2529, %v2582
      %v2589 = vmul.f32 %v2534, %v2582
      %v2590 = vmul.f32 %v2539, %v2582
      %v2591 = vmul.f32 %v2544, %v2582
      %v2592 = vmul.f32 %v2549, %v2582
      %v2593 = vmul.f32 %v2554, %v2582
      %v2594 = vmul.f32 %v2559, %v2582
      %v2595 = vmul.f32 %v2564, %v2582
      %v2596 = vmul.f32 %v2569, %v2582
      %v2597 = vmul.f32 %v2574, %v2582
      %v2598 = vmul.f32 %v2579, %v2582
      %2600 = vset.pattern.permute.xlu0 0
      %2601 = vperm.xlu0 %2600, %v2583
      %v2602 = vpop.permute.xlu0 %2601
      %2605 = vset.pattern.permute.xlu0 0
      %2606 = vperm.xlu0 %2605, %v2584
      %v2607 = vpop.permute.xlu0 %2606
      %2610 = vset.pattern.permute.xlu0 0
      %2611 = vperm.xlu0 %2610, %v2585
      %v2612 = vpop.permute.xlu0 %2611
      %2615 = vset.pattern.permute.xlu0 0
      %2616 = vperm.xlu0 %2615, %v2586
      %v2617 = vpop.permute.xlu0 %2616
      %2620 = vset.pattern.permute.xlu0 0
      %2621 = vperm.xlu0 %2620, %v2587
      %v2622 = vpop.permute.xlu0 %2621
      %2625 = vset.pattern.permute.xlu0 0
      %2626 = vperm.xlu0 %2625, %v2588
      %v2627 = vpop.permute.xlu0 %2626
      %2630 = vset.pattern.permute.xlu0 0
      %2631 = vperm.xlu0 %2630, %v2589
      %v2632 = vpop.permute.xlu0 %2631
      %2635 = vset.pattern.permute.xlu0 0
      %2636 = vperm.xlu0 %2635, %v2590
      %v2637 = vpop.permute.xlu0 %2636
      %2640 = vset.pattern.permute.xlu0 0
      %2641 = vperm.xlu0 %2640, %v2591
      %v2642 = vpop.permute.xlu0 %2641
      %2645 = vset.pattern.permute.xlu0 0
      %2646 = vperm.xlu0 %2645, %v2592
      %v2647 = vpop.permute.xlu0 %2646
      %2650 = vset.pattern.permute.xlu0 0
      %2651 = vperm.xlu0 %2650, %v2593
      %v2652 = vpop.permute.xlu0 %2651
      %2655 = vset.pattern.permute.xlu0 0
      %2656 = vperm.xlu0 %2655, %v2594
      %v2657 = vpop.permute.xlu0 %2656
      %2660 = vset.pattern.permute.xlu0 0
      %2661 = vperm.xlu0 %2660, %v2595
      %v2662 = vpop.permute.xlu0 %2661
      %2665 = vset.pattern.permute.xlu0 0
      %2666 = vperm.xlu0 %2665, %v2596
      %v2667 = vpop.permute.xlu0 %2666
      %2670 = vset.pattern.permute.xlu0 0
      %2671 = vperm.xlu0 %2670, %v2597
      %v2672 = vpop.permute.xlu0 %2671
      %2675 = vset.pattern.permute.xlu0 0
      %2676 = vperm.xlu0 %2675, %v2598
      %v2677 = vpop.permute.xlu0 %2676
      %v2679 = vsub.f32 %v2373, %v2602
      %v2680 = vsub.f32 %v2374, %v2607
      %v2681 = vsub.f32 %v2375, %v2612
      %v2682 = vsub.f32 %v2376, %v2617
      %v2683 = vsub.f32 %v2377, %v2622
      %v2684 = vsub.f32 %v2378, %v2627
      %v2685 = vsub.f32 %v2379, %v2632
      %v2686 = vsub.f32 %v2380, %v2637
      %v2687 = vsub.f32 %v2381, %v2642
      %v2688 = vsub.f32 %v2382, %v2647
      %v2689 = vsub.f32 %v2383, %v2652
      %v2690 = vsub.f32 %v2384, %v2657
      %v2691 = vsub.f32 %v2385, %v2662
      %v2692 = vsub.f32 %v2386, %v2667
      %v2693 = vsub.f32 %v2387, %v2672
      %v2694 = vsub.f32 %v2388, %v2677
      %v2695 = vsel %vm2372, %v2679, 0.0
      %v2696 = vsel %vm2372, %v2680, 0.0
      %v2697 = vsel %vm2372, %v2681, 0.0
      %v2698 = vsel %vm2372, %v2682, 0.0
      %v2699 = vsel %vm2372, %v2683, 0.0
      %v2700 = vsel %vm2372, %v2684, 0.0
      %v2701 = vsel %vm2372, %v2685, 0.0
      %v2702 = vsel %vm2372, %v2686, 0.0
      %v2703 = vsel %vm2372, %v2687, 0.0
      %v2704 = vsel %vm2372, %v2688, 0.0
      %v2705 = vsel %vm2372, %v2689, 0.0
      %v2706 = vsel %vm2372, %v2690, 0.0
      %v2707 = vsel %vm2372, %v2691, 0.0
      %v2708 = vsel %vm2372, %v2692, 0.0
      %v2709 = vsel %vm2372, %v2693, 0.0
      %v2710 = vsel %vm2372, %v2694, 0.0
      %v2711 = vmul.f32 %v2695, %v2695
      %v2712 = vmul.f32 %v2696, %v2696
      %v2713 = vmul.f32 %v2697, %v2697
      %v2714 = vmul.f32 %v2698, %v2698
      %v2715 = vmul.f32 %v2699, %v2699
      %v2716 = vmul.f32 %v2700, %v2700
      %v2717 = vmul.f32 %v2701, %v2701
      %v2718 = vmul.f32 %v2702, %v2702
      %v2719 = vmul.f32 %v2703, %v2703
      %v2720 = vmul.f32 %v2704, %v2704
      %v2721 = vmul.f32 %v2705, %v2705
      %v2722 = vmul.f32 %v2706, %v2706
      %v2723 = vmul.f32 %v2707, %v2707
      %v2724 = vmul.f32 %v2708, %v2708
      %v2725 = vmul.f32 %v2709, %v2709
      %v2726 = vmul.f32 %v2710, %v2710
      %v2728 = vsel %vm432, %v2711, 0
      %v2731 = vsel %vm432, %v2712, 0
      %v2734 = vsel %vm432, %v2713, 0
      %v2737 = vsel %vm432, %v2714, 0
      %v2740 = vsel %vm432, %v2715, 0
      %v2743 = vsel %vm432, %v2716, 0
      %v2746 = vsel %vm432, %v2717, 0
      %v2749 = vsel %vm432, %v2718, 0
      %v2752 = vsel %vm432, %v2719, 0
      %v2755 = vsel %vm432, %v2720, 0
      %v2758 = vsel %vm432, %v2721, 0
      %v2761 = vsel %vm432, %v2722, 0
      %v2764 = vsel %vm432, %v2723, 0
      %v2767 = vsel %vm432, %v2724, 0
      %v2770 = vsel %vm432, %v2725, 0
      %v2773 = vsel %vm432, %v2726, 0
      %2775 = vmatprep.subr.mxu0 0.0
      %2776 = vmatpush1.msra.mxu0 0.0
      %2777 = vmatprep.subr.mxu0 0.0
      %2778 = vmatpush1.msra.mxu0 0.0
      %2779 = vmatprep.subr.mxu0 0.0
      %2780 = vmatpush1.msra.mxu0 0.0
      %2781 = vmatprep.subr.mxu0 0.0
      %2782 = vmatpush1.msra.mxu0 0.0
      %2783 = vmatprep.subr.mxu0 0.0
      %2784 = vmatpush1.msra.mxu0 0.0
      %2785 = vmatprep.subr.mxu0 0.0
      %2786 = vmatpush1.msra.mxu0 0.0
      %2787 = vmatprep.subr.mxu0 0.0
      %2788 = vmatpush1.msra.mxu0 0.0
      %2789 = vmatprep.subr.mxu0 0.0
      %2790 = vmatpush1.msra.mxu0 0.0
      %2791 = vmatprep.subr.mxu0 0.0
      %2792 = vmatpush1.msra.mxu0 1.0
      %2793 = vmatprep.subr.mxu0 0.0
      %2794 = vmatpush1.msra.mxu0 1.0
      %2795 = vmatprep.subr.mxu0 0.0
      %2796 = vmatpush1.msra.mxu0 1.0
      %2797 = vmatprep.subr.mxu0 0.0
      %2798 = vmatpush1.msra.mxu0 1.0
      %2799 = vmatprep.subr.mxu0 0.0
      %2800 = vmatpush1.msra.mxu0 1.0
      %2801 = vmatprep.subr.mxu0 0.0
      %2802 = vmatpush1.msra.mxu0 1.0
      %2803 = vmatprep.subr.mxu0 0.0
      %2804 = vmatpush1.msra.mxu0 1.0
      %2805 = vmatprep.subr.mxu0 0.0
      %2806 = vmatpush1.msra.mxu0 1.0
      %2807 = vmatprep.subr.mxu0 0.0
      %2808 = vmatpush2.msra.mxu0 0.0
      %2809 = vmatprep.subr.mxu0 0.0
      %2810 = vmatpush2.msra.mxu0 0.0
      %2811 = vmatprep.subr.mxu0 0.0
      %2812 = vmatpush2.msra.mxu0 0.0
      %2813 = vmatprep.subr.mxu0 0.0
      %2814 = vmatpush2.msra.mxu0 0.0
      %2815 = vmatprep.subr.mxu0 0.0
      %2816 = vmatpush2.msra.mxu0 0.0
      %2817 = vmatprep.subr.mxu0 0.0
      %2818 = vmatpush2.msra.mxu0 0.0
      %2819 = vmatprep.subr.mxu0 0.0
      %2820 = vmatpush2.msra.mxu0 0.0
      %2821 = vmatprep.subr.mxu0 0.0
      %2822 = vmatpush2.msra.mxu0 0.0
      %2823 = vmatprep.subr.mxu0 0.0
      %2824 = vmatpush2.msra.mxu0 0.0
      %2825 = vmatprep.subr.mxu0 0.0
      %2826 = vmatpush2.msra.mxu0 0.0
      %2827 = vmatprep.subr.mxu0 0.0
      %2828 = vmatpush2.msra.mxu0 0.0
      %2829 = vmatprep.subr.mxu0 0.0
      %2830 = vmatpush2.msra.mxu0 0.0
      %2831 = vmatprep.subr.mxu0 0.0
      %2832 = vmatpush2.msra.mxu0 0.0
      %2833 = vmatprep.subr.mxu0 0.0
      %2834 = vmatpush2.msra.mxu0 0.0
      %2835 = vmatprep.subr.mxu0 0.0
      %2836 = vmatpush2.msra.mxu0 0.0
      %2837 = vmatprep.subr.mxu0 0.0
      %2838 = vmatpush2.msra.mxu0 0.0
      %2839 = vmatprep.mubr.f32.mxu0 0.0
      %2840 = vmatmul.mubr.f32.gmra.mxu0 %v2728
      %v2841 = vpop.f32.mrf.mxu0
      %v2842 = vadd.f32 0.0, %v2841
      %v2843 = vpop.f32.mrf.mxu0
      %2844 = vmatprep.mubr.f32.mxu0 0.0
      %2845 = vmatmul.mubr.f32.gmra.mxu0 %v2731
      %v2846 = vpop.f32.mrf.mxu0
      %v2847 = vadd.f32 0.0, %v2846
      %v2848 = vpop.f32.mrf.mxu0
      %2849 = vmatprep.mubr.f32.mxu0 0.0
      %2850 = vmatmul.mubr.f32.gmra.mxu0 %v2734
      %v2851 = vpop.f32.mrf.mxu0
      %v2852 = vadd.f32 0.0, %v2851
      %v2853 = vpop.f32.mrf.mxu0
      %2854 = vmatprep.mubr.f32.mxu0 0.0
      %2855 = vmatmul.mubr.f32.gmra.mxu0 %v2737
      %v2856 = vpop.f32.mrf.mxu0
      %v2857 = vadd.f32 0.0, %v2856
      %v2858 = vpop.f32.mrf.mxu0
      %2859 = vmatprep.mubr.f32.mxu0 0.0
      %2860 = vmatmul.mubr.f32.gmra.mxu0 %v2740
      %v2861 = vpop.f32.mrf.mxu0
      %v2862 = vadd.f32 0.0, %v2861
      %v2863 = vpop.f32.mrf.mxu0
      %2864 = vmatprep.mubr.f32.mxu0 0.0
      %2865 = vmatmul.mubr.f32.gmra.mxu0 %v2743
      %v2866 = vpop.f32.mrf.mxu0
      %v2867 = vadd.f32 0.0, %v2866
      %v2868 = vpop.f32.mrf.mxu0
      %2869 = vmatprep.mubr.f32.mxu0 0.0
      %2870 = vmatmul.mubr.f32.gmra.mxu0 %v2746
      %v2871 = vpop.f32.mrf.mxu0
      %v2872 = vadd.f32 0.0, %v2871
      %v2873 = vpop.f32.mrf.mxu0
      %2874 = vmatprep.mubr.f32.mxu0 0.0
      %2875 = vmatmul.mubr.f32.gmra.mxu0 %v2749
      %v2876 = vpop.f32.mrf.mxu0
      %v2877 = vadd.f32 0.0, %v2876
      %v2878 = vpop.f32.mrf.mxu0
      %2879 = vmatprep.mubr.f32.mxu0 0.0
      %2880 = vmatmul.mubr.f32.gmra.mxu0 %v2752
      %v2881 = vpop.f32.mrf.mxu0
      %v2882 = vadd.f32 0.0, %v2881
      %v2883 = vpop.f32.mrf.mxu0
      %2884 = vmatprep.mubr.f32.mxu0 0.0
      %2885 = vmatmul.mubr.f32.gmra.mxu0 %v2755
      %v2886 = vpop.f32.mrf.mxu0
      %v2887 = vadd.f32 0.0, %v2886
      %v2888 = vpop.f32.mrf.mxu0
      %2889 = vmatprep.mubr.f32.mxu0 0.0
      %2890 = vmatmul.mubr.f32.gmra.mxu0 %v2758
      %v2891 = vpop.f32.mrf.mxu0
      %v2892 = vadd.f32 0.0, %v2891
      %v2893 = vpop.f32.mrf.mxu0
      %2894 = vmatprep.mubr.f32.mxu0 0.0
      %2895 = vmatmul.mubr.f32.gmra.mxu0 %v2761
      %v2896 = vpop.f32.mrf.mxu0
      %v2897 = vadd.f32 0.0, %v2896
      %v2898 = vpop.f32.mrf.mxu0
      %2899 = vmatprep.mubr.f32.mxu0 0.0
      %2900 = vmatmul.mubr.f32.gmra.mxu0 %v2764
      %v2901 = vpop.f32.mrf.mxu0
      %v2902 = vadd.f32 0.0, %v2901
      %v2903 = vpop.f32.mrf.mxu0
      %2904 = vmatprep.mubr.f32.mxu0 0.0
      %2905 = vmatmul.mubr.f32.gmra.mxu0 %v2767
      %v2906 = vpop.f32.mrf.mxu0
      %v2907 = vadd.f32 0.0, %v2906
      %v2908 = vpop.f32.mrf.mxu0
      %2909 = vmatprep.mubr.f32.mxu0 0.0
      %2910 = vmatmul.mubr.f32.gmra.mxu0 %v2770
      %v2911 = vpop.f32.mrf.mxu0
      %v2912 = vadd.f32 0.0, %v2911
      %v2913 = vpop.f32.mrf.mxu0
      %2914 = vmatprep.mubr.f32.mxu0 0.0
      %2915 = vmatmul.mubr.f32.gmra.mxu0 %v2773
      %v2916 = vpop.f32.mrf.mxu0
      %v2917 = vadd.f32 0.0, %v2916
      %v2918 = vpop.f32.mrf.mxu0
      %2919 = vdwg.mxu0
      %v2920 = vmul.f32 %v2842, %v2582
      %v2921 = vmul.f32 %v2847, %v2582
      %v2922 = vmul.f32 %v2852, %v2582
      %v2923 = vmul.f32 %v2857, %v2582
      %v2924 = vmul.f32 %v2862, %v2582
      %v2925 = vmul.f32 %v2867, %v2582
      %v2926 = vmul.f32 %v2872, %v2582
      %v2927 = vmul.f32 %v2877, %v2582
      %v2928 = vmul.f32 %v2882, %v2582
      %v2929 = vmul.f32 %v2887, %v2582
      %v2930 = vmul.f32 %v2892, %v2582
      %v2931 = vmul.f32 %v2897, %v2582
      %v2932 = vmul.f32 %v2902, %v2582
      %v2933 = vmul.f32 %v2907, %v2582
      %v2934 = vmul.f32 %v2912, %v2582
      %v2935 = vmul.f32 %v2917, %v2582
      %v2936 = vadd.f32 %v2920, 1e-05
      %v2937 = vadd.f32 %v2921, 1e-05
      %v2938 = vadd.f32 %v2922, 1e-05
      %v2939 = vadd.f32 %v2923, 1e-05
      %v2940 = vadd.f32 %v2924, 1e-05
      %v2941 = vadd.f32 %v2925, 1e-05
      %v2942 = vadd.f32 %v2926, 1e-05
      %v2943 = vadd.f32 %v2927, 1e-05
      %v2944 = vadd.f32 %v2928, 1e-05
      %v2945 = vadd.f32 %v2929, 1e-05
      %v2946 = vadd.f32 %v2930, 1e-05
      %v2947 = vadd.f32 %v2931, 1e-05
      %v2948 = vadd.f32 %v2932, 1e-05
      %v2949 = vadd.f32 %v2933, 1e-05
      %v2950 = vadd.f32 %v2934, 1e-05
      %v2951 = vadd.f32 %v2935, 1e-05
      %v2952 = vrsqrt.pop %v2936
      %v2953 = vrsqrt.pop %v2937
      %v2954 = vrsqrt.pop %v2938
      %v2955 = vrsqrt.pop %v2939
      %v2956 = vrsqrt.pop %v2940
      %v2957 = vrsqrt.pop %v2941
      %v2958 = vrsqrt.pop %v2942
      %v2959 = vrsqrt.pop %v2943
      %v2960 = vrsqrt.pop %v2944
      %v2961 = vrsqrt.pop %v2945
      %v2962 = vrsqrt.pop %v2946
      %v2963 = vrsqrt.pop %v2947
      %v2964 = vrsqrt.pop %v2948
      %v2965 = vrsqrt.pop %v2949
      %v2966 = vrsqrt.pop %v2950
      %v2967 = vrsqrt.pop %v2951
      %2969 = vset.pattern.permute.xlu0 0
      %2970 = vperm.xlu0 %2969, %v2952
      %v2971 = vpop.permute.xlu0 %2970
      %2974 = vset.pattern.permute.xlu0 0
      %2975 = vperm.xlu0 %2974, %v2953
      %v2976 = vpop.permute.xlu0 %2975
      %2979 = vset.pattern.permute.xlu0 0
      %2980 = vperm.xlu0 %2979, %v2954
      %v2981 = vpop.permute.xlu0 %2980
      %2984 = vset.pattern.permute.xlu0 0
      %2985 = vperm.xlu0 %2984, %v2955
      %v2986 = vpop.permute.xlu0 %2985
      %2989 = vset.pattern.permute.xlu0 0
      %2990 = vperm.xlu0 %2989, %v2956
      %v2991 = vpop.permute.xlu0 %2990
      %2994 = vset.pattern.permute.xlu0 0
      %2995 = vperm.xlu0 %2994, %v2957
      %v2996 = vpop.permute.xlu0 %2995
      %2999 = vset.pattern.permute.xlu0 0
      %3000 = vperm.xlu0 %2999, %v2958
      %v3001 = vpop.permute.xlu0 %3000
      %3004 = vset.pattern.permute.xlu0 0
      %3005 = vperm.xlu0 %3004, %v2959
      %v3006 = vpop.permute.xlu0 %3005
      %3009 = vset.pattern.permute.xlu0 0
      %3010 = vperm.xlu0 %3009, %v2960
      %v3011 = vpop.permute.xlu0 %3010
      %3014 = vset.pattern.permute.xlu0 0
      %3015 = vperm.xlu0 %3014, %v2961
      %v3016 = vpop.permute.xlu0 %3015
      %3019 = vset.pattern.permute.xlu0 0
      %3020 = vperm.xlu0 %3019, %v2962
      %v3021 = vpop.permute.xlu0 %3020
      %3024 = vset.pattern.permute.xlu0 0
      %3025 = vperm.xlu0 %3024, %v2963
      %v3026 = vpop.permute.xlu0 %3025
      %3029 = vset.pattern.permute.xlu0 0
      %3030 = vperm.xlu0 %3029, %v2964
      %v3031 = vpop.permute.xlu0 %3030
      %3034 = vset.pattern.permute.xlu0 0
      %3035 = vperm.xlu0 %3034, %v2965
      %v3036 = vpop.permute.xlu0 %3035
      %3039 = vset.pattern.permute.xlu0 0
      %3040 = vperm.xlu0 %3039, %v2966
      %v3041 = vpop.permute.xlu0 %3040
      %3044 = vset.pattern.permute.xlu0 0
      %3045 = vperm.xlu0 %3044, %v2967
      %v3046 = vpop.permute.xlu0 %3045
      %v3048 = vmul.f32 %v2695, %v2971
      %v3049 = vmul.f32 %v2696, %v2976
      %v3050 = vmul.f32 %v2697, %v2981
      %v3051 = vmul.f32 %v2698, %v2986
      %v3052 = vmul.f32 %v2699, %v2991
      %v3053 = vmul.f32 %v2700, %v2996
      %v3054 = vmul.f32 %v2701, %v3001
      %v3055 = vmul.f32 %v2702, %v3006
      %v3056 = vmul.f32 %v2703, %v3011
      %v3057 = vmul.f32 %v2704, %v3016
      %v3058 = vmul.f32 %v2705, %v3021
      %v3059 = vmul.f32 %v2706, %v3026
      %v3060 = vmul.f32 %v2707, %v3031
      %v3061 = vmul.f32 %v2708, %v3036
      %v3062 = vmul.f32 %v2709, %v3041
      %v3063 = vmul.f32 %v2710, %v3046
      %v3064 = vld [vmem:[%s3 + $0x12] sm:$0x1]
      %v3065 = vld [vmem:[%s3 + $0x1a] sm:$0x1]
      %v3066 = vlaneseq
      %v3067 = vshrl.u32 %v3066, 7
      %v3068 = vsub.s32 0, %v3067
      %v3069 = vrot.slane %v3064, %v3068
      %v3070 = vmul.f32 %v3069, %v3048
      %v3071 = vmul.f32 %v3069, %v3049
      %v3072 = vmul.f32 %v3069, %v3050
      %v3073 = vmul.f32 %v3069, %v3051
      %v3074 = vmul.f32 %v3069, %v3052
      %v3075 = vmul.f32 %v3069, %v3053
      %v3076 = vmul.f32 %v3069, %v3054
      %v3077 = vmul.f32 %v3069, %v3055
      %v3078 = vmul.f32 %v3069, %v3056
      %v3079 = vmul.f32 %v3069, %v3057
      %v3080 = vmul.f32 %v3069, %v3058
      %v3081 = vmul.f32 %v3069, %v3059
      %v3082 = vmul.f32 %v3069, %v3060
      %v3083 = vmul.f32 %v3069, %v3061
      %v3084 = vmul.f32 %v3069, %v3062
      %v3085 = vmul.f32 %v3069, %v3063
      %v3086 = vlaneseq
      %v3087 = vshrl.u32 %v3086, 7
      %v3088 = vsub.s32 0, %v3087
      %v3089 = vrot.slane %v3065, %v3088
      %v3090 = vadd.f32 %v3070, %v3089
      %v3091 = vadd.f32 %v3071, %v3089
      %v3092 = vadd.f32 %v3072, %v3089
      %v3093 = vadd.f32 %v3073, %v3089
      %v3094 = vadd.f32 %v3074, %v3089
      %v3095 = vadd.f32 %v3075, %v3089
      %v3096 = vadd.f32 %v3076, %v3089
      %v3097 = vadd.f32 %v3077, %v3089
      %v3098 = vadd.f32 %v3078, %v3089
      %v3099 = vadd.f32 %v3079, %v3089
      %v3100 = vadd.f32 %v3080, %v3089
      %v3101 = vadd.f32 %v3081, %v3089
      %v3102 = vadd.f32 %v3082, %v3089
      %v3103 = vadd.f32 %v3083, %v3089
      %v3104 = vadd.f32 %v3084, %v3089
      %v3105 = vadd.f32 %v3085, %v3089
      %v3106 = vsel %vm2372, %v3090, 0.0
      %v3107 = vsel %vm2372, %v3091, 0.0
      %v3108 = vsel %vm2372, %v3092, 0.0
      %v3109 = vsel %vm2372, %v3093, 0.0
      %v3110 = vsel %vm2372, %v3094, 0.0
      %v3111 = vsel %vm2372, %v3095, 0.0
      %v3112 = vsel %vm2372, %v3096, 0.0
      %v3113 = vsel %vm2372, %v3097, 0.0
      %v3114 = vsel %vm2372, %v3098, 0.0
      %v3115 = vsel %vm2372, %v3099, 0.0
      %v3116 = vsel %vm2372, %v3100, 0.0
      %v3117 = vsel %vm2372, %v3101, 0.0
      %v3118 = vsel %vm2372, %v3102, 0.0
      %v3119 = vsel %vm2372, %v3103, 0.0
      %v3120 = vsel %vm2372, %v3104, 0.0
      %v3121 = vsel %vm2372, %v3105, 0.0
      %v3122 = vmax.f32 %v3106, 0.0
      %v3123 = vmax.f32 %v3107, 0.0
      %v3124 = vmax.f32 %v3108, 0.0
      %v3125 = vmax.f32 %v3109, 0.0
      %v3126 = vmax.f32 %v3110, 0.0
      %v3127 = vmax.f32 %v3111, 0.0
      %v3128 = vmax.f32 %v3112, 0.0
      %v3129 = vmax.f32 %v3113, 0.0
      %v3130 = vmax.f32 %v3114, 0.0
      %v3131 = vmax.f32 %v3115, 0.0
      %v3132 = vmax.f32 %v3116, 0.0
      %v3133 = vmax.f32 %v3117, 0.0
      %v3134 = vmax.f32 %v3118, 0.0
      %v3135 = vmax.f32 %v3119, 0.0
      %v3136 = vmax.f32 %v3120, 0.0
      %v3137 = vmax.f32 %v3121, 0.0
      %v3138 = vld [vmem:[%s3 + $0xa8] sm:$0x7]
      %v3139 = vld [vmem:[%s3 + $0xb0] sm:$0x7]
      %3141 = vset.pattern.permute.xlu0 0
      %3142 = vperm.xlu0 %3141, %v3139
      %v3143 = vpop.permute.xlu0 %3142
      %v3146 = vsel %vm432, %v3138, 0
      %v3149 = vsel %vm432, %v3122, 0
      %v3152 = vsel %vm432, %v3123, 0
      %v3155 = vsel %vm432, %v3124, 0
      %v3158 = vsel %vm432, %v3125, 0
      %v3161 = vsel %vm432, %v3126, 0
      %v3164 = vsel %vm432, %v3127, 0
      %v3167 = vsel %vm432, %v3128, 0
      %v3170 = vsel %vm432, %v3129, 0
      %v3173 = vsel %vm432, %v3130, 0
      %v3176 = vsel %vm432, %v3131, 0
      %v3179 = vsel %vm432, %v3132, 0
      %v3182 = vsel %vm432, %v3133, 0
      %v3185 = vsel %vm432, %v3134, 0
      %v3188 = vsel %vm432, %v3135, 0
      %v3191 = vsel %vm432, %v3136, 0
      %v3194 = vsel %vm432, %v3137, 0
      %3196 = vmatprep.subr.mxu0 0.0
      %3197 = vmatpush1.xpose.msra.mxu0 %v3194
      %3198 = vmatprep.subr.mxu0 0.0
      %3199 = vmatpush1.xpose.msra.mxu0 %v3191
      %3200 = vmatprep.subr.mxu0 0.0
      %3201 = vmatpush1.xpose.msra.mxu0 %v3188
      %3202 = vmatprep.subr.mxu0 0.0
      %3203 = vmatpush1.xpose.msra.mxu0 %v3185
      %3204 = vmatprep.subr.mxu0 0.0
      %3205 = vmatpush1.xpose.msra.mxu0 %v3182
      %3206 = vmatprep.subr.mxu0 0.0
      %3207 = vmatpush1.xpose.msra.mxu0 %v3179
      %3208 = vmatprep.subr.mxu0 0.0
      %3209 = vmatpush1.xpose.msra.mxu0 %v3176
      %3210 = vmatprep.subr.mxu0 0.0
      %3211 = vmatpush1.xpose.msra.mxu0 %v3173
      %3212 = vmatprep.subr.mxu0 0.0
      %3213 = vmatpush1.xpose.msra.mxu0 %v3170
      %3214 = vmatprep.subr.mxu0 0.0
      %3215 = vmatpush1.xpose.msra.mxu0 %v3167
      %3216 = vmatprep.subr.mxu0 0.0
      %3217 = vmatpush1.xpose.msra.mxu0 %v3164
      %3218 = vmatprep.subr.mxu0 0.0
      %3219 = vmatpush1.xpose.msra.mxu0 %v3161
      %3220 = vmatprep.subr.mxu0 0.0
      %3221 = vmatpush1.xpose.msra.mxu0 %v3158
      %3222 = vmatprep.subr.mxu0 0.0
      %3223 = vmatpush1.xpose.msra.mxu0 %v3155
      %3224 = vmatprep.subr.mxu0 0.0
      %3225 = vmatpush1.xpose.msra.mxu0 %v3152
      %3226 = vmatprep.subr.mxu0 0.0
      %3227 = vmatpush1.xpose.msra.mxu0 %v3149
      %3228 = vmatprep.subr.mxu0 0.0
      %3229 = vmatpush2.xpose.msra.mxu0 0.0
      %3230 = vmatprep.subr.mxu0 0.0
      %3231 = vmatpush2.xpose.msra.mxu0 0.0
      %3232 = vmatprep.subr.mxu0 0.0
      %3233 = vmatpush2.xpose.msra.mxu0 0.0
      %3234 = vmatprep.subr.mxu0 0.0
      %3235 = vmatpush2.xpose.msra.mxu0 0.0
      %3236 = vmatprep.subr.mxu0 0.0
      %3237 = vmatpush2.xpose.msra.mxu0 0.0
      %3238 = vmatprep.subr.mxu0 0.0
      %3239 = vmatpush2.xpose.msra.mxu0 0.0
      %3240 = vmatprep.subr.mxu0 0.0
      %3241 = vmatpush2.xpose.msra.mxu0 0.0
      %3242 = vmatprep.subr.mxu0 0.0
      %3243 = vmatpush2.xpose.msra.mxu0 0.0
      %3244 = vmatprep.subr.mxu0 0.0
      %3245 = vmatpush2.xpose.msra.mxu0 0.0
      %3246 = vmatprep.subr.mxu0 0.0
      %3247 = vmatpush2.xpose.msra.mxu0 0.0
      %3248 = vmatprep.subr.mxu0 0.0
      %3249 = vmatpush2.xpose.msra.mxu0 0.0
      %3250 = vmatprep.subr.mxu0 0.0
      %3251 = vmatpush2.xpose.msra.mxu0 0.0
      %3252 = vmatprep.subr.mxu0 0.0
      %3253 = vmatpush2.xpose.msra.mxu0 0.0
      %3254 = vmatprep.subr.mxu0 0.0
      %3255 = vmatpush2.xpose.msra.mxu0 0.0
      %3256 = vmatprep.subr.mxu0 0.0
      %3257 = vmatpush2.xpose.msra.mxu0 0.0
      %3258 = vmatprep.subr.mxu0 0.0
      %3259 = vmatpush2.xpose.msra.mxu0 0.0
      %3260 = vmatprep.mubr.f32.mxu0 0.0
      %3261 = vmatmul.mubr.f32.gmra.mxu0 %v3146
      %v3262 = vpop.f32.mrf.mxu0
      %v3263 = vadd.f32 %v3143, %v3262
      %v3264 = vpop.f32.mrf.mxu0
      %3265 = vdwg.mxu0
      %3266 = vst [vmem:[%s175] sm:$0x7] %v3263
      %p3267 = scmp.lt.s32.totalorder %s30, 3
      %s3268 = scalar_select %p3267, %s30, 3
      %p3269 = scmp.lt.s32.totalorder %s29, 0
      %s3270 = scalar_select %p3269, %s29, 0
      %s3271 = sadd.s32 %s3270, %s3268
      %s3272 = smul.addr %s3271, 4
      %s3273 = scalar_lea.vmem %s4, %s3272
      // Predicated region
      $region29: #{lcmipnet_forward.1} parent=27 // pred_check
        %p3274 = pneg %p104
      $region30: #{lcmipnet_forward.1} parent=27 // pred_check_branch
        %3276 = sbr.rel (%p3274) target = $region32
      $region31: #{lcmipnet_forward.1} parent=27 // pred_region
        _
      $region32: #{lcmipnet_forward.1} parent=27 // pred_fallthru
        _
    $region28: #{lcmipnet_forward.1} parent=5 // pred_fallthru
      _
    %p3277 = scmp.le.s32.totalorder 2, %s20
    // Predicated region
    $region33: #{lcmipnet_forward.1} parent=5 // pred_check
      %p3278 = pneg %p3277
    $region34: #{lcmipnet_forward.1} parent=5 // pred_check_branch
      %3280 = sbr.rel (%p3278) target = $region36
    $region35: #{lcmipnet_forward.1} parent=5 // pred_region
      %s3281 = ssub.s32 %s20, 2
      // Predicated region
      $region37: #{lcmipnet_forward.1} parent=35 // pred_check
        %p3282 = pneg %p110
      $region38: #{lcmipnet_forward.1} parent=35 // pred_check_branch
        %3284 = sbr.rel (%p3282) target = $region40
      $region39: #{lcmipnet_forward.1} parent=35 // pred_region
        %p3285 = scmp.lt.s32.totalorder %s32, 3
        %s3286 = scalar_select %p3285, %s32, 3
        %p3287 = scmp.lt.s32.totalorder %s31, 0
        %s3288 = scalar_select %p3287, %s31, 0
        %s3289 = sadd.s32 %s3288, %s3286
        %s3290 = smul.addr %s3289, 4
        %s3291 = scalar_lea.vmem %s4, %s3290
      $region40: #{lcmipnet_forward.1} parent=35 // pred_fallthru
        _
    $region36: #{lcmipnet_forward.1} parent=5 // pred_fallthru
      _
  $region6: #{lcmipnet_forward.1} parent=0 // loop_footer
    %s24 = sadd.s32 1, %s20
  $region7: #{lcmipnet_forward.1} parent=0 // loop_footer_branch
    %19 = sbr.rel target = $region3
  $region8: #{lcmipnet_forward.1} parent=0 // loop_exit
    _

</llo_original>
